<compile_context>
chip_gen: v7x
topology: tpu7x:2x2x1
jax: 0.10.0
libtpu: 0.0.40
codegen_flags: <defaults>
</compile_context>

<pallas_src>
import functools

import jax
import jax.numpy as jnp
from jax import lax
from jax.experimental import pallas as pl
from jax.experimental.pallas import tpu as pltpu


# --------------------------------------------------------------------------- #
# Kernels
# --------------------------------------------------------------------------- #
def _label_prop_resident_kernel(alpha_ref, A_ref, E0_ref, dinv_ref, w_ref,
                                E_out_ref, loss_ref, *, K):
    """Whole-A-in-VMEM variant (grid=())."""
    alpha = alpha_ref[0, 0]
    beta = 1.0 - alpha

    E = E0_ref[...]                                            # [N, 2] f32
    if K > 0:
        A = A_ref[...]                                         # [N, N] f32 / bf16
        n = E.shape[0]
        # Hoist beta*d_inv and its [N, 2] broadcast above the unrolled loop
        # (JAX does not CSE broadcast_in_dim inside the loop).
        bd = jnp.broadcast_to(beta * dinv_ref[...], (n, 2))    # [N, 2] f32
        for _ in range(K):                                     # K static -> unrolled
            neigh = jnp.dot(A, E.astype(A.dtype),
                            preferred_element_type=jnp.float32)   # [N, 2] f32
            E = alpha * E + bd * neigh

    E_out_ref[...] = E
    # Fused NLL epilogue: loss = -sum(W * log(max(E, 1e-6))).
    loss_ref[0, 0] = -jnp.sum(w_ref[...] * jnp.log(jnp.maximum(E, 1e-6)))


def _label_prop_stream_kernel(A_blk_ref, E0_ref, alpha_blk_ref, bd_blk_ref,
                              E_out_ref, E_buf, *, TM, N):
    """A-streamed variant: grid=(K, N//TM).

    A row blocks (TM, N) are auto-pipelined from HBM each step; E is carried
    across the K axis in a double-buffered VMEM scratch laid out as [2N, 2]
    (read rows [src*N : src*N+N], write rows [dst*N : dst*N+N] -> Jacobi update).
    """
    k = pl.program_id(0)
    i = pl.program_id(1)

    @pl.when((k == 0) & (i == 0))
    def _init():
        E_buf[pl.ds(0, N), :] = E0_ref[...]

    src = lax.rem(k, 2)
    dst = 1 - src
    src_base = pl.multiple_of(src * N, N)
    dst_base = pl.multiple_of(dst * N, N)
    row0 = pl.multiple_of(i * TM, TM)
    src_row = pl.multiple_of(src_base + row0, TM)
    dst_row = pl.multiple_of(dst_base + row0, TM)

    E_old = E_buf[pl.ds(src_base, N), :]                             # [N, 2] f32
    neigh = jnp.dot(A_blk_ref[...], E_old.astype(A_blk_ref.dtype),
                    preferred_element_type=jnp.float32)              # [TM, 2] f32
    e_rows = E_buf[pl.ds(src_row, TM), :]                            # [TM, 2] f32
    e_new = alpha_blk_ref[...] * e_rows + bd_blk_ref[...] * neigh    # [TM, 2] f32

    E_buf[pl.ds(dst_row, TM), :] = e_new
    E_out_ref[...] = e_new


# --------------------------------------------------------------------------- #
# Planning helpers
# --------------------------------------------------------------------------- #
_STREAM_TM_CANDIDATES = (2048, 1024, 512, 256, 128, 64, 32, 16, 8)


def _vmem_capacity_bytes():
    try:
        cap = getattr(pltpu.get_tpu_info(), "vmem_capacity_bytes", None)
        if cap:
            return int(cap)
    except Exception:
        pass
    return 64 << 20        # conservative fallback (v7x per-TensorCore VMEM)


def _plan(N, a_itemsize, K, mode, stream_tm):
    """Pick resident vs streamed execution, the row-block size and VMEM budget."""
    cap = _vmem_capacity_bytes()
    a_bytes = N * N * a_itemsize
    min_rows = 8 if a_itemsize >= 4 else 16          # sublane packing: f32 / bf16

    if mode == "auto":
        # Keep A VMEM-resident while it uses < ~45% of per-core VMEM
        # (128 MiB on v5e/v6e, 64 MiB on v7x); beyond that, stream row blocks.
        mode = "resident" if a_bytes <= int(0.45 * cap) else "stream"
    if mode == "stream" and (K == 0 or N % min_rows != 0):
        # TODO(synk): pad N for the streamed path instead of falling back.
        mode = "resident"

    if mode == "resident":
        vmem_limit = int(min(max(a_bytes + (8 << 20), 16 << 20), int(0.85 * cap)))
        return "resident", None, vmem_limit

    if stream_tm is not None:
        tm = int(stream_tm)
        if N % tm != 0 or tm % min_rows != 0:
            raise ValueError(f"stream_tm={tm} must divide N={N} and be a multiple of {min_rows}")
    else:
        budget = int(0.35 * cap)                     # double-buffered A-block budget
        tm = None
        for cand in _STREAM_TM_CANDIDATES:
            if cand % min_rows == 0 and N % cand == 0 and 2 * cand * N * a_itemsize <= budget:
                tm = cand
                break
        if tm is None:
            for cand in reversed(_STREAM_TM_CANDIDATES):
                if cand % min_rows == 0 and N % cand == 0:
                    tm = cand
                    break
    vmem_limit = int(min(max(2 * tm * N * a_itemsize + 32 * N + (8 << 20), 16 << 20),
                         int(0.85 * cap)))
    return "stream", tm, vmem_limit


# --------------------------------------------------------------------------- #
# Wrapper (mirrors LabelPropagationLoss.forward)
# --------------------------------------------------------------------------- #
def label_propagation_loss(raw_alpha, raw_mask, rows, cols, values,
                           positive_nodes, negative_nodes, N,
                           K=10, pos_weight=1.0,
                           a_dtype=jnp.bfloat16, mode="auto", stream_tm=None):
    """Returns (total_loss, updated_A_dense, E, mask).

    Notes:
      * Duplicate (row, col) COO entries are summed when densifying A (matches
        sparse to_dense semantics).
      * Row sums / d_inv are computed in f32 from the f32 dense A; the bf16 copy
        of A handed to the kernel only affects the propagation matmuls.
      * Empty positive/negative sets are clamped to count 1 and duplicate node
        indices count once in the loss mean (documented divergence from the
        index-gather mean in the PyTorch reference).
    """
    N = int(N)
    K = int(K)

    # ---- glue: learnable params -> effective values, sparse COO -> dense ----
    effective_alpha = jax.nn.sigmoid(jnp.asarray(raw_alpha, jnp.float32))
    mask = jax.nn.sigmoid(raw_mask.astype(jnp.float32))                 # [nnz]
    updated_values = values.astype(jnp.float32) * mask                  # [nnz]
    updated_A = jnp.zeros((N, N), jnp.float32).at[rows, cols].add(updated_values)

    # Exact f32 row sums / d_inv outside the kernel (unaffected by bf16 A copy).
    row_sums = jnp.sum(updated_A, axis=1, keepdims=True)                # [N, 1] f32
    d_inv = 1.0 / jnp.maximum(row_sums, 1e-12)                          # [N, 1] f32

    # Initial label distribution.
    E0 = (jnp.zeros((N, 2), jnp.float32)
          .at[positive_nodes, 1].set(1.0)
          .at[negative_nodes, 0].set(1.0))

    # Fused loss weights: loss = -sum(W * log(max(E, 1e-6))).
    pos_mask = jnp.zeros((N,), jnp.float32).at[positive_nodes].set(1.0)
    neg_mask = jnp.zeros((N,), jnp.float32).at[negative_nodes].set(1.0)
    pos_cnt = jnp.maximum(jnp.sum(pos_mask), 1.0)
    neg_cnt = jnp.maximum(jnp.sum(neg_mask), 1.0)
    W = jnp.stack([neg_mask / neg_cnt,
                   float(pos_weight) * pos_mask / pos_cnt], axis=1)     # [N, 2]

    # bf16 copy of A for the kernel only (halves VMEM footprint and per-step
    # vld/DMA traffic); the returned updated_A stays f32.
    A_kernel = updated_A.astype(a_dtype)

    run_mode, tm, vmem_limit = _plan(N, jnp.dtype(a_dtype).itemsize, K, mode, stream_tm)

    if run_mode == "resident":
        kernel = functools.partial(_label_prop_resident_kernel, K=K)
        E_out, loss = pl.pallas_call(
            kernel,
            out_shape=(jax.ShapeDtypeStruct((N, 2), jnp.float32),
                       jax.ShapeDtypeStruct((1, 1), jnp.float32)),
            in_specs=[
                pl.BlockSpec(memory_space=pltpu.MemorySpace.SMEM),   # alpha  (1, 1)
                pl.BlockSpec(memory_space=pltpu.MemorySpace.VMEM),   # A      [N, N]
                pl.BlockSpec(memory_space=pltpu.MemorySpace.VMEM),   # E0     [N, 2]
                pl.BlockSpec(memory_space=pltpu.MemorySpace.VMEM),   # d_inv  [N, 1]
                pl.BlockSpec(memory_space=pltpu.MemorySpace.VMEM),   # W      [N, 2]
            ],
            out_specs=(pl.BlockSpec(memory_space=pltpu.MemorySpace.VMEM),   # E
                       pl.BlockSpec(memory_space=pltpu.MemorySpace.SMEM)),  # loss
            compiler_params=pltpu.CompilerParams(vmem_limit_bytes=vmem_limit),
        )(effective_alpha.reshape(1, 1), A_kernel, E0, d_inv, W)
        total_loss = loss[0, 0]
    else:
        n_blk = N // tm
        alpha_col = effective_alpha * jnp.ones((N, 1), jnp.float32)     # [N, 1]
        bd_col = (1.0 - effective_alpha) * d_inv                        # [N, 1]
        kernel = functools.partial(_label_prop_stream_kernel, TM=tm, N=N)
        E_out = pl.pallas_call(
            kernel,
            out_shape=jax.ShapeDtypeStruct((N, 2), jnp.float32),
            grid_spec=pltpu.PrefetchScalarGridSpec(
                num_scalar_prefetch=0,
                grid=(K, n_blk),
                in_specs=[
                    pl.BlockSpec((tm, N), lambda k, i: (i, 0)),   # A row block (HBM->VMEM)
                    pl.BlockSpec((N, 2), lambda k, i: (0, 0)),    # E0 (resident)
                    pl.BlockSpec((tm, 1), lambda k, i: (i, 0)),   # alpha column
                    pl.BlockSpec((tm, 1), lambda k, i: (i, 0)),   # (1-alpha)*d_inv column
                ],
                out_specs=pl.BlockSpec((tm, 2), lambda k, i: (i, 0)),
                scratch_shapes=[pltpu.VMEM((2 * N, 2), jnp.float32)],
            ),
            # TODO(synk): core_parallel split of the row-block axis needs a per-step
            # exchange of the [N, 2] E carry between TensorCores; 'arbitrary' for now.
            compiler_params=pltpu.CompilerParams(
                dimension_semantics=("arbitrary", "arbitrary"),
                vmem_limit_bytes=vmem_limit),
        )(A_kernel, E0, alpha_col, bd_col)
        # Tiny O(N) NLL epilogue in XLA; A streaming dominates in this regime.
        total_loss = -jnp.sum(W * jnp.log(jnp.maximum(E_out, 1e-6)))

    return total_loss, updated_A, E_out, mask


# --------------------------------------------------------------------------- #
# Plain-JAX reference (PyTorch forward semantics)
# --------------------------------------------------------------------------- #
def _reference(raw_alpha, raw_mask, rows, cols, values,
               positive_nodes, negative_nodes, N, K=10, pos_weight=1.0):
    alpha = jax.nn.sigmoid(raw_alpha)
    mask = jax.nn.sigmoid(raw_mask)
    A = jnp.zeros((N, N), jnp.float32).at[rows, cols].add(values * mask)
    d_inv = 1.0 / jnp.clip(A.sum(axis=1), 1e-12, None)
    E = jnp.zeros((N, 2), jnp.float32)
    E = E.at[positive_nodes, 1].set(1.0)
    E = E.at[negative_nodes, 0].set(1.0)
    for _ in range(K):
        neigh = d_inv[:, None] * (A @ E)
        E = alpha * E + (1.0 - alpha) * neigh
    pos_p = jnp.clip(E[positive_nodes, 1], 1e-6, None)
    neg_p = jnp.clip(E[negative_nodes, 0], 1e-6, None)
    return pos_weight * (-jnp.mean(jnp.log(pos_p))) + (-jnp.mean(jnp.log(neg_p))), E


def _make_problem(N, key):
    """Deterministic synthetic sparse adjacency (self-loop + 2 neighbors per node)."""
    idx = jnp.arange(N, dtype=jnp.int32)
    rows = jnp.concatenate([idx, idx, idx])                          # nnz = 3N
    cols = jnp.concatenate([idx, (idx + 1) % N, (idx + 3) % N])
    values = jnp.ones((3 * N,), jnp.float32)
    raw_alpha = jnp.asarray(0.5, jnp.float32)                        # nn.Parameter(alpha)
    raw_mask = jnp.ones((3 * N,), jnp.float32)                       # nn.Parameter(ones(nnz))
    perm = jax.random.permutation(key, N)
    positive_nodes = perm[:8]
    negative_nodes = perm[8:16]
    return raw_alpha, raw_mask, rows, cols, values, positive_nodes, negative_nodes


if __name__ == "__main__":
    key = jax.random.PRNGKey(0)
    k1, k2 = jax.random.split(key)
    K = 10
    pos_weight = 1.0

    # --- 1) resident path, f32 A: matches the f32 reference tightly -----------
    N = 128
    args = _make_problem(N, k1)
    loss, updated_A, E, mask = label_propagation_loss(
        *args, N, K=K, pos_weight=pos_weight, a_dtype=jnp.float32, mode="resident")
    jax.block_until_ready((loss, updated_A, E, mask))
    ref_loss, ref_E = _reference(*args, N, K=K, pos_weight=pos_weight)
    assert jnp.allclose(E, ref_E, atol=1e-5), "E mismatch (resident f32)"
    assert jnp.allclose(loss, ref_loss, atol=1e-5), "loss mismatch (resident f32)"

    # --- 2) resident path, bf16 A (default perf config): loose tolerance ------
    loss_bf, _, E_bf, _ = label_propagation_loss(
        *args, N, K=K, pos_weight=pos_weight)        # auto -> resident, bf16 A
    jax.block_until_ready((loss_bf, E_bf))
    assert jnp.allclose(E_bf, ref_E, atol=1e-2), "E mismatch (resident bf16)"
    assert jnp.allclose(loss_bf, ref_loss, atol=5e-2, rtol=2e-2), "loss mismatch (resident bf16)"

    # --- 3) streamed path (large-N / v7x structure), forced small for testing -
    N2 = 256
    args2 = _make_problem(N2, k2)
    loss_s, _, E_s, _ = label_propagation_loss(
        *args2, N2, K=K, pos_weight=pos_weight,
        a_dtype=jnp.float32, mode="stream", stream_tm=64)
    jax.block_until_ready((loss_s, E_s))
    ref_loss2, ref_E2 = _reference(*args2, N2, K=K, pos_weight=pos_weight)
    assert jnp.allclose(E_s, ref_E2, atol=1e-5), "E mismatch (streamed f32)"
    assert jnp.allclose(loss_s, ref_loss2, atol=1e-5), "loss mismatch (streamed f32)"

    print("KERNEL_OK")
</pallas_src>

<mosaic_0001>
module attributes {stable_mosaic.version = 11 : i64} {
  func.func @_label_prop_resident_kernel(%arg0: memref<1x1xf32, #tpu.memory_space<smem>>, %arg1: memref<128x128xf32, #tpu.memory_space<vmem>>, %arg2: memref<128x2xf32, #tpu.memory_space<vmem>>, %arg3: memref<128x1xf32, #tpu.memory_space<vmem>>, %arg4: memref<128x2xf32, #tpu.memory_space<vmem>>, %arg5: memref<128x2xf32, #tpu.memory_space<vmem>>, %arg6: memref<1x1xf32, #tpu.memory_space<smem>>) attributes {dimension_semantics = [], scalar_prefetch = 0 : i64, scratch_operands = 0 : i64, tpu.core_type = #tpu.core_type<tc>} {
    %c0 = arith.constant 0 : index
    %c0_0 = arith.constant 0 : index
    %0 = memref.load %arg0[%c0, %c0_0] : memref<1x1xf32, #tpu.memory_space<smem>>
    %cst = arith.constant 1.000000e+00 : f32
    %1 = arith.subf %cst, %0 : f32
    %c0_1 = arith.constant 0 : index
    %c0_2 = arith.constant 0 : index
    %2 = vector.load %arg2[%c0_1, %c0_2] : memref<128x2xf32, #tpu.memory_space<vmem>>, vector<128x2xf32>
    %c0_3 = arith.constant 0 : index
    %c0_4 = arith.constant 0 : index
    %3 = vector.load %arg1[%c0_3, %c0_4] : memref<128x128xf32, #tpu.memory_space<vmem>>, vector<128x128xf32>
    %c0_5 = arith.constant 0 : index
    %c0_6 = arith.constant 0 : index
    %4 = vector.load %arg3[%c0_5, %c0_6] : memref<128x1xf32, #tpu.memory_space<vmem>>, vector<128x1xf32>
    %5 = vector.broadcast %1 : f32 to vector<128x1xf32>
    %6 = arith.mulf %5, %4 : vector<128x1xf32>
    %7 = vector.shape_cast %6 : vector<128x1xf32> to vector<128x1xf32>
    %8 = vector.broadcast %7 : vector<128x1xf32> to vector<128x2xf32>
    %cst_7 = arith.constant dense<0.000000e+00> : vector<128x2xf32>
    %9 = tpu.matmul %3, %2, %cst_7 {dimension_numbers = #tpu.dot_dimension_numbers<[1], [0], [0], [1], [0, 0, 1, 1], [], []>} : vector<128x128xf32>, vector<128x2xf32>, vector<128x2xf32> -> vector<128x2xf32>
    %10 = vector.broadcast %0 : f32 to vector<128x2xf32>
    %11 = arith.mulf %10, %2 : vector<128x2xf32>
    %12 = arith.mulf %8, %9 : vector<128x2xf32>
    %13 = arith.addf %11, %12 : vector<128x2xf32>
    %cst_8 = arith.constant dense<0.000000e+00> : vector<128x2xf32>
    %14 = tpu.matmul %3, %13, %cst_8 {dimension_numbers = #tpu.dot_dimension_numbers<[1], [0], [0], [1], [0, 0, 1, 1], [], []>} : vector<128x128xf32>, vector<128x2xf32>, vector<128x2xf32> -> vector<128x2xf32>
    %15 = vector.broadcast %0 : f32 to vector<128x2xf32>
    %16 = arith.mulf %15, %13 : vector<128x2xf32>
    %17 = arith.mulf %8, %14 : vector<128x2xf32>
    %18 = arith.addf %16, %17 : vector<128x2xf32>
    %cst_9 = arith.constant dense<0.000000e+00> : vector<128x2xf32>
    %19 = tpu.matmul %3, %18, %cst_9 {dimension_numbers = #tpu.dot_dimension_numbers<[1], [0], [0], [1], [0, 0, 1, 1], [], []>} : vector<128x128xf32>, vector<128x2xf32>, vector<128x2xf32> -> vector<128x2xf32>
    %20 = vector.broadcast %0 : f32 to vector<128x2xf32>
    %21 = arith.mulf %20, %18 : vector<128x2xf32>
    %22 = arith.mulf %8, %19 : vector<128x2xf32>
    %23 = arith.addf %21, %22 : vector<128x2xf32>
    %cst_10 = arith.constant dense<0.000000e+00> : vector<128x2xf32>
    %24 = tpu.matmul %3, %23, %cst_10 {dimension_numbers = #tpu.dot_dimension_numbers<[1], [0], [0], [1], [0, 0, 1, 1], [], []>} : vector<128x128xf32>, vector<128x2xf32>, vector<128x2xf32> -> vector<128x2xf32>
    %25 = vector.broadcast %0 : f32 to vector<128x2xf32>
    %26 = arith.mulf %25, %23 : vector<128x2xf32>
    %27 = arith.mulf %8, %24 : vector<128x2xf32>
    %28 = arith.addf %26, %27 : vector<128x2xf32>
    %cst_11 = arith.constant dense<0.000000e+00> : vector<128x2xf32>
    %29 = tpu.matmul %3, %28, %cst_11 {dimension_numbers = #tpu.dot_dimension_numbers<[1], [0], [0], [1], [0, 0, 1, 1], [], []>} : vector<128x128xf32>, vector<128x2xf32>, vector<128x2xf32> -> vector<128x2xf32>
    %30 = vector.broadcast %0 : f32 to vector<128x2xf32>
    %31 = arith.mulf %30, %28 : vector<128x2xf32>
    %32 = arith.mulf %8, %29 : vector<128x2xf32>
    %33 = arith.addf %31, %32 : vector<128x2xf32>
    %cst_12 = arith.constant dense<0.000000e+00> : vector<128x2xf32>
    %34 = tpu.matmul %3, %33, %cst_12 {dimension_numbers = #tpu.dot_dimension_numbers<[1], [0], [0], [1], [0, 0, 1, 1], [], []>} : vector<128x128xf32>, vector<128x2xf32>, vector<128x2xf32> -> vector<128x2xf32>
    %35 = vector.broadcast %0 : f32 to vector<128x2xf32>
    %36 = arith.mulf %35, %33 : vector<128x2xf32>
    %37 = arith.mulf %8, %34 : vector<128x2xf32>
    %38 = arith.addf %36, %37 : vector<128x2xf32>
    %cst_13 = arith.constant dense<0.000000e+00> : vector<128x2xf32>
    %39 = tpu.matmul %3, %38, %cst_13 {dimension_numbers = #tpu.dot_dimension_numbers<[1], [0], [0], [1], [0, 0, 1, 1], [], []>} : vector<128x128xf32>, vector<128x2xf32>, vector<128x2xf32> -> vector<128x2xf32>
    %40 = vector.broadcast %0 : f32 to vector<128x2xf32>
    %41 = arith.mulf %40, %38 : vector<128x2xf32>
    %42 = arith.mulf %8, %39 : vector<128x2xf32>
    %43 = arith.addf %41, %42 : vector<128x2xf32>
    %cst_14 = arith.constant dense<0.000000e+00> : vector<128x2xf32>
    %44 = tpu.matmul %3, %43, %cst_14 {dimension_numbers = #tpu.dot_dimension_numbers<[1], [0], [0], [1], [0, 0, 1, 1], [], []>} : vector<128x128xf32>, vector<128x2xf32>, vector<128x2xf32> -> vector<128x2xf32>
    %45 = vector.broadcast %0 : f32 to vector<128x2xf32>
    %46 = arith.mulf %45, %43 : vector<128x2xf32>
    %47 = arith.mulf %8, %44 : vector<128x2xf32>
    %48 = arith.addf %46, %47 : vector<128x2xf32>
    %cst_15 = arith.constant dense<0.000000e+00> : vector<128x2xf32>
    %49 = tpu.matmul %3, %48, %cst_15 {dimension_numbers = #tpu.dot_dimension_numbers<[1], [0], [0], [1], [0, 0, 1, 1], [], []>} : vector<128x128xf32>, vector<128x2xf32>, vector<128x2xf32> -> vector<128x2xf32>
    %50 = vector.broadcast %0 : f32 to vector<128x2xf32>
    %51 = arith.mulf %50, %48 : vector<128x2xf32>
    %52 = arith.mulf %8, %49 : vector<128x2xf32>
    %53 = arith.addf %51, %52 : vector<128x2xf32>
    %cst_16 = arith.constant dense<0.000000e+00> : vector<128x2xf32>
    %54 = tpu.matmul %3, %53, %cst_16 {dimension_numbers = #tpu.dot_dimension_numbers<[1], [0], [0], [1], [0, 0, 1, 1], [], []>} : vector<128x128xf32>, vector<128x2xf32>, vector<128x2xf32> -> vector<128x2xf32>
    %55 = vector.broadcast %0 : f32 to vector<128x2xf32>
    %56 = arith.mulf %55, %53 : vector<128x2xf32>
    %57 = arith.mulf %8, %54 : vector<128x2xf32>
    %58 = arith.addf %56, %57 : vector<128x2xf32>
    %c0_17 = arith.constant 0 : index
    %c0_18 = arith.constant 0 : index
    %59 = vector.load %arg5[%c0_17, %c0_18] : memref<128x2xf32, #tpu.memory_space<vmem>>, vector<128x2xf32>
    tpu.vector_store %arg5[%c0_17, %c0_18], %58 {strides = array<i32>} : memref<128x2xf32, #tpu.memory_space<vmem>>, vector<128x2xf32>,
    %c0_19 = arith.constant 0 : index
    %c0_20 = arith.constant 0 : index
    %60 = vector.load %arg4[%c0_19, %c0_20] : memref<128x2xf32, #tpu.memory_space<vmem>>, vector<128x2xf32>
    %cst_21 = arith.constant 9.99999997E-7 : f32
    %61 = vector.broadcast %cst_21 : f32 to vector<128x2xf32>
    %62 = arith.maximumf %58, %61 : vector<128x2xf32>
    %63 = math.log %62 : vector<128x2xf32>
    %64 = arith.mulf %60, %63 : vector<128x2xf32>
    %65 = vector.shape_cast %64 : vector<128x2xf32> to vector<1x128x2xf32>
    %cst_22 = arith.constant dense<0.000000e+00> : vector<1xf32>
    %66 = vector.multi_reduction <add>, %65, %cst_22 [1, 2] : vector<1x128x2xf32> to vector<1xf32>
    %67 = vector.shape_cast %66 : vector<1xf32> to vector<1x1x1xf32>
    %68 = vector.extract %67[0, 0, 0] : f32 from vector<1x1x1xf32>
    %cst_23 = arith.constant 0.000000e+00 : f32
    %69 = arith.subf %cst_23, %68 : f32
    %c0_24 = arith.constant 0 : index
    %c0_25 = arith.constant 0 : index
    %70 = memref.load %arg6[%c0_24, %c0_25] : memref<1x1xf32, #tpu.memory_space<smem>>
    memref.store %69, %arg6[%c0_24, %c0_25] : memref<1x1xf32, #tpu.memory_space<smem>>
    return
  }
}

</mosaic_0001>

<llo_original>
// kernel: tpu_custom_call.1
$region0: #{tpu_custom_call.1}
  #allocation0 [shape = 'u32[]', space=smem, size = 0x4, offset = 0x4, fixed_abs, tag = 'smem constant byte address 0x4 - core index']
  #allocation1 [shape = 'u32[144,128]{1,0:T(1,128)}', space=vmem, size = 0x12000, scoped, tag = 'internal scratch']
  #allocation2 [shape = 'f32[1,1]{1,0:T(1,128)S(6)}', space=smem, size = 0x200, scoped, tag = 'scoped memory for tpu_custom_call.1']
  %s0 = inlined_call_operand.<no memory space> [shape: f32[1,1], index: 0, kind: input, shape index: {}]
  %s1 = inlined_call_operand.vmem [shape: f32[128,128], index: 1, kind: input, shape index: {}]
  %s2 = inlined_call_operand.vmem [shape: f32[128,2], index: 2, kind: input, shape index: {}]
  %s3 = inlined_call_operand.vmem [shape: f32[128,1], index: 3, kind: input, shape index: {}]
  %s4 = inlined_call_operand.vmem [shape: f32[128,2], index: 4, kind: input, shape index: {}]
  %s5 = inlined_call_operand.vmem [shape: f32[128,2], index: 5, kind: output, shape index: {0}]
  %s6 = inlined_call_operand.hbm [shape: f32[1,1], index: 6, kind: output, shape index: {1}]
  %7 = xla_tuple %s5, %s6
  %s8 = sld [smem:[#allocation0]]
  $region38: #{tpu_custom_call.1} parent=0
    _
  %s10 = ssub.s32 1, %s8
  %s11 = scalar_select 0, %s10, %s8
  %12 = sst [smem:[#allocation2]] %s0
  $region1: #{tpu_custom_call.1} parent=0
    #allocation3 [shape = 'u8[512]{0}', space=smem, size = 0x200, scoped, tag = 'output window, operand 1, single buffered']
    #allocation4 [shape = 's32[1]{0}', space=sflag, size = 0x4, scoped, tag = 'scoped memory for tpu_custom_call.1']
    %13 = vsyncpa [#allocation4], 0
    // Predicated region
    $region2: #{tpu_custom_call.1} parent=1 // pred_check
      _
    $region3: #{tpu_custom_call.1} parent=1 // pred_check_branch
      %15 = sbr.rel (0) target = $region5
    $region4: #{tpu_custom_call.1} parent=1 // pred_region
      _
    $region5: #{tpu_custom_call.1} parent=1 // pred_fallthru
      _
    // Predicated region
    $region6: #{tpu_custom_call.1} parent=1 // pred_check
      _
    $region7: #{tpu_custom_call.1} parent=1 // pred_check_branch
      %17 = sbr.rel (0) target = $region9
    $region8: #{tpu_custom_call.1} parent=1 // pred_region
      _
    $region9: #{tpu_custom_call.1} parent=1 // pred_fallthru
      _
    // Predicated region
    $region10: #{tpu_custom_call.1} parent=1 // pred_check
      _
    $region11: #{tpu_custom_call.1} parent=1 // pred_check_branch
      %19 = sbr.rel (0) target = $region13
    $region12: #{tpu_custom_call.1} parent=1 // pred_region
      _
    $region13: #{tpu_custom_call.1} parent=1 // pred_fallthru
      _
    // Predicated region
    $region14: #{tpu_custom_call.1} parent=1 // pred_check
      _
    $region15: #{tpu_custom_call.1} parent=1 // pred_check_branch
      %21 = sbr.rel (0) target = $region17
    $region16: #{tpu_custom_call.1} parent=1 // pred_region
      _
    $region17: #{tpu_custom_call.1} parent=1 // pred_fallthru
      _
    // Predicated region
    $region18: #{tpu_custom_call.1} parent=1 // pred_check
      _
    $region19: #{tpu_custom_call.1} parent=1 // pred_check_branch
      %23 = sbr.rel (0) target = $region21
    $region20: #{tpu_custom_call.1} parent=1 // pred_region
      _
    $region21: #{tpu_custom_call.1} parent=1 // pred_fallthru
      _
    %s24 = sld [smem:[#allocation2]]
    %s25 = ssub.f32 1.0, %s24
    %v26 = vld [vmem:[%s2] sm:$0xff]
    %v27 = vld [vmem:[%s2 + $0x8] sm:$0xff]
    %v28 = vld [vmem:[%s2 + $0x10] sm:$0xff]
    %v29 = vld [vmem:[%s2 + $0x18] sm:$0xff]
    %v30 = vld [vmem:[%s2 + $0x20] sm:$0xff]
    %v31 = vld [vmem:[%s2 + $0x28] sm:$0xff]
    %v32 = vld [vmem:[%s2 + $0x30] sm:$0xff]
    %v33 = vld [vmem:[%s2 + $0x38] sm:$0xff]
    %v34 = vld [vmem:[%s2 + $0x40] sm:$0xff]
    %v35 = vld [vmem:[%s2 + $0x48] sm:$0xff]
    %v36 = vld [vmem:[%s2 + $0x50] sm:$0xff]
    %v37 = vld [vmem:[%s2 + $0x58] sm:$0xff]
    %v38 = vld [vmem:[%s2 + $0x60] sm:$0xff]
    %v39 = vld [vmem:[%s2 + $0x68] sm:$0xff]
    %v40 = vld [vmem:[%s2 + $0x70] sm:$0xff]
    %v41 = vld [vmem:[%s2 + $0x78] sm:$0xff]
    %v42 = vld [vmem:[%s1] sm:$0xff]
    %v43 = vld [vmem:[%s1 + $0x8] sm:$0xff]
    %v44 = vld [vmem:[%s1 + $0x10] sm:$0xff]
    %v45 = vld [vmem:[%s1 + $0x18] sm:$0xff]
    %v46 = vld [vmem:[%s1 + $0x20] sm:$0xff]
    %v47 = vld [vmem:[%s1 + $0x28] sm:$0xff]
    %v48 = vld [vmem:[%s1 + $0x30] sm:$0xff]
    %v49 = vld [vmem:[%s1 + $0x38] sm:$0xff]
    %v50 = vld [vmem:[%s1 + $0x40] sm:$0xff]
    %v51 = vld [vmem:[%s1 + $0x48] sm:$0xff]
    %v52 = vld [vmem:[%s1 + $0x50] sm:$0xff]
    %v53 = vld [vmem:[%s1 + $0x58] sm:$0xff]
    %v54 = vld [vmem:[%s1 + $0x60] sm:$0xff]
    %v55 = vld [vmem:[%s1 + $0x68] sm:$0xff]
    %v56 = vld [vmem:[%s1 + $0x70] sm:$0xff]
    %v57 = vld [vmem:[%s1 + $0x78] sm:$0xff]
    %v58 = vld [vmem:[%s3] sm:$0xff]
    %v59 = vld [vmem:[%s3 + $0x8] sm:$0xff]
    %v60 = vld [vmem:[%s3 + $0x10] sm:$0xff]
    %v61 = vld [vmem:[%s3 + $0x18] sm:$0xff]
    %v62 = vld [vmem:[%s3 + $0x20] sm:$0xff]
    %v63 = vld [vmem:[%s3 + $0x28] sm:$0xff]
    %v64 = vld [vmem:[%s3 + $0x30] sm:$0xff]
    %v65 = vld [vmem:[%s3 + $0x38] sm:$0xff]
    %v66 = vld [vmem:[%s3 + $0x40] sm:$0xff]
    %v67 = vld [vmem:[%s3 + $0x48] sm:$0xff]
    %v68 = vld [vmem:[%s3 + $0x50] sm:$0xff]
    %v69 = vld [vmem:[%s3 + $0x58] sm:$0xff]
    %v70 = vld [vmem:[%s3 + $0x60] sm:$0xff]
    %v71 = vld [vmem:[%s3 + $0x68] sm:$0xff]
    %v72 = vld [vmem:[%s3 + $0x70] sm:$0xff]
    %v73 = vld [vmem:[%s3 + $0x78] sm:$0xff]
    %v74 = vstv %s25
    %v75 = vmul.f32 %v74, %v58
    %v76 = vmul.f32 %v74, %v59
    %v77 = vmul.f32 %v74, %v60
    %v78 = vmul.f32 %v74, %v61
    %v79 = vmul.f32 %v74, %v62
    %v80 = vmul.f32 %v74, %v63
    %v81 = vmul.f32 %v74, %v64
    %v82 = vmul.f32 %v74, %v65
    %v83 = vmul.f32 %v74, %v66
    %v84 = vmul.f32 %v74, %v67
    %v85 = vmul.f32 %v74, %v68
    %v86 = vmul.f32 %v74, %v69
    %v87 = vmul.f32 %v74, %v70
    %v88 = vmul.f32 %v74, %v71
    %v89 = vmul.f32 %v74, %v72
    %v90 = vmul.f32 %v74, %v73
    %92 = vset.pattern.permute.xlu0 0
    %93 = vperm.xlu0 %92, %v75
    %v94 = vpop.permute.xlu0 %93
    %97 = vset.pattern.permute.xlu0 0
    %98 = vperm.xlu0 %97, %v76
    %v99 = vpop.permute.xlu0 %98
    %102 = vset.pattern.permute.xlu0 0
    %103 = vperm.xlu0 %102, %v77
    %v104 = vpop.permute.xlu0 %103
    %107 = vset.pattern.permute.xlu0 0
    %108 = vperm.xlu0 %107, %v78
    %v109 = vpop.permute.xlu0 %108
    %112 = vset.pattern.permute.xlu0 0
    %113 = vperm.xlu0 %112, %v79
    %v114 = vpop.permute.xlu0 %113
    %117 = vset.pattern.permute.xlu0 0
    %118 = vperm.xlu0 %117, %v80
    %v119 = vpop.permute.xlu0 %118
    %122 = vset.pattern.permute.xlu0 0
    %123 = vperm.xlu0 %122, %v81
    %v124 = vpop.permute.xlu0 %123
    %127 = vset.pattern.permute.xlu0 0
    %128 = vperm.xlu0 %127, %v82
    %v129 = vpop.permute.xlu0 %128
    %132 = vset.pattern.permute.xlu0 0
    %133 = vperm.xlu0 %132, %v83
    %v134 = vpop.permute.xlu0 %133
    %137 = vset.pattern.permute.xlu0 0
    %138 = vperm.xlu0 %137, %v84
    %v139 = vpop.permute.xlu0 %138
    %142 = vset.pattern.permute.xlu0 0
    %143 = vperm.xlu0 %142, %v85
    %v144 = vpop.permute.xlu0 %143
    %147 = vset.pattern.permute.xlu0 0
    %148 = vperm.xlu0 %147, %v86
    %v149 = vpop.permute.xlu0 %148
    %152 = vset.pattern.permute.xlu0 0
    %153 = vperm.xlu0 %152, %v87
    %v154 = vpop.permute.xlu0 %153
    %157 = vset.pattern.permute.xlu0 0
    %158 = vperm.xlu0 %157, %v88
    %v159 = vpop.permute.xlu0 %158
    %162 = vset.pattern.permute.xlu0 0
    %163 = vperm.xlu0 %162, %v89
    %v164 = vpop.permute.xlu0 %163
    %167 = vset.pattern.permute.xlu0 0
    %168 = vperm.xlu0 %167, %v90
    %v169 = vpop.permute.xlu0 %168
    %171 = vmatprep.subr.mxu0 0.0
    %172 = vmatpush1.msra.mxu0 %v26
    %173 = vmatprep.subr.mxu0 0.0
    %174 = vmatpush1.msra.mxu0 %v27
    %175 = vmatprep.subr.mxu0 0.0
    %176 = vmatpush1.msra.mxu0 %v28
    %177 = vmatprep.subr.mxu0 0.0
    %178 = vmatpush1.msra.mxu0 %v29
    %179 = vmatprep.subr.mxu0 0.0
    %180 = vmatpush1.msra.mxu0 %v30
    %181 = vmatprep.subr.mxu0 0.0
    %182 = vmatpush1.msra.mxu0 %v31
    %183 = vmatprep.subr.mxu0 0.0
    %184 = vmatpush1.msra.mxu0 %v32
    %185 = vmatprep.subr.mxu0 0.0
    %186 = vmatpush1.msra.mxu0 %v33
    %187 = vmatprep.subr.mxu0 0.0
    %188 = vmatpush1.msra.mxu0 %v34
    %189 = vmatprep.subr.mxu0 0.0
    %190 = vmatpush1.msra.mxu0 %v35
    %191 = vmatprep.subr.mxu0 0.0
    %192 = vmatpush1.msra.mxu0 %v36
    %193 = vmatprep.subr.mxu0 0.0
    %194 = vmatpush1.msra.mxu0 %v37
    %195 = vmatprep.subr.mxu0 0.0
    %196 = vmatpush1.msra.mxu0 %v38
    %197 = vmatprep.subr.mxu0 0.0
    %198 = vmatpush1.msra.mxu0 %v39
    %199 = vmatprep.subr.mxu0 0.0
    %200 = vmatpush1.msra.mxu0 %v40
    %201 = vmatprep.subr.mxu0 0.0
    %202 = vmatpush1.msra.mxu0 %v41
    %203 = vmatprep.subr.mxu0 0.0
    %204 = vmatpush1.msra.mxu0 0.0
    %205 = vmatprep.subr.mxu0 0.0
    %206 = vmatpush1.msra.mxu0 0.0
    %207 = vmatprep.subr.mxu0 0.0
    %208 = vmatpush1.msra.mxu0 0.0
    %209 = vmatprep.subr.mxu0 0.0
    %210 = vmatpush1.msra.mxu0 0.0
    %211 = vmatprep.subr.mxu0 0.0
    %212 = vmatpush1.msra.mxu0 0.0
    %213 = vmatprep.subr.mxu0 0.0
    %214 = vmatpush1.msra.mxu0 0.0
    %215 = vmatprep.subr.mxu0 0.0
    %216 = vmatpush1.msra.mxu0 0.0
    %217 = vmatprep.subr.mxu0 0.0
    %218 = vmatpush1.msra.mxu0 0.0
    %219 = vmatprep.subr.mxu0 0.0
    %220 = vmatpush1.msra.mxu0 0.0
    %221 = vmatprep.subr.mxu0 0.0
    %222 = vmatpush1.msra.mxu0 0.0
    %223 = vmatprep.subr.mxu0 0.0
    %224 = vmatpush1.msra.mxu0 0.0
    %225 = vmatprep.subr.mxu0 0.0
    %226 = vmatpush1.msra.mxu0 0.0
    %227 = vmatprep.subr.mxu0 0.0
    %228 = vmatpush1.msra.mxu0 0.0
    %229 = vmatprep.subr.mxu0 0.0
    %230 = vmatpush1.msra.mxu0 0.0
    %231 = vmatprep.subr.mxu0 0.0
    %232 = vmatpush1.msra.mxu0 0.0
    %233 = vmatprep.subr.mxu0 0.0
    %234 = vmatpush1.msra.mxu0 0.0
    %235 = vmatprep.mubr.f32.mxu0 0.0
    %236 = vmatmul.mubr.f32.gmra.mrb[0].mxu0 %v42
    %v237 = vpop.f32.mrb[0].mxu0
    %v238 = vadd.f32 0.0, %v237
    %v239 = vpop.f32.mrb[0].mxu0
    %240 = vmatprep.mubr.f32.mxu0 0.0
    %241 = vmatmul.mubr.f32.gmra.mrb[0].mxu0 %v43
    %v242 = vpop.f32.mrb[0].mxu0
    %v243 = vadd.f32 0.0, %v242
    %v244 = vpop.f32.mrb[0].mxu0
    %245 = vmatprep.mubr.f32.mxu0 0.0
    %246 = vmatmul.mubr.f32.gmra.mrb[0].mxu0 %v44
    %v247 = vpop.f32.mrb[0].mxu0
    %v248 = vadd.f32 0.0, %v247
    %v249 = vpop.f32.mrb[0].mxu0
    %250 = vmatprep.mubr.f32.mxu0 0.0
    %251 = vmatmul.mubr.f32.gmra.mrb[0].mxu0 %v45
    %v252 = vpop.f32.mrb[0].mxu0
    %v253 = vadd.f32 0.0, %v252
    %v254 = vpop.f32.mrb[0].mxu0
    %255 = vmatprep.mubr.f32.mxu0 0.0
    %256 = vmatmul.mubr.f32.gmra.mrb[0].mxu0 %v46
    %v257 = vpop.f32.mrb[0].mxu0
    %v258 = vadd.f32 0.0, %v257
    %v259 = vpop.f32.mrb[0].mxu0
    %260 = vmatprep.mubr.f32.mxu0 0.0
    %261 = vmatmul.mubr.f32.gmra.mrb[0].mxu0 %v47
    %v262 = vpop.f32.mrb[0].mxu0
    %v263 = vadd.f32 0.0, %v262
    %v264 = vpop.f32.mrb[0].mxu0
    %265 = vmatprep.mubr.f32.mxu0 0.0
    %266 = vmatmul.mubr.f32.gmra.mrb[0].mxu0 %v48
    %v267 = vpop.f32.mrb[0].mxu0
    %v268 = vadd.f32 0.0, %v267
    %v269 = vpop.f32.mrb[0].mxu0
    %270 = vmatprep.mubr.f32.mxu0 0.0
    %271 = vmatmul.mubr.f32.gmra.mrb[0].mxu0 %v49
    %v272 = vpop.f32.mrb[0].mxu0
    %v273 = vadd.f32 0.0, %v272
    %v274 = vpop.f32.mrb[0].mxu0
    %275 = vmatprep.mubr.f32.mxu0 0.0
    %276 = vmatmul.mubr.f32.gmra.mrb[0].mxu0 %v50
    %v277 = vpop.f32.mrb[0].mxu0
    %v278 = vadd.f32 0.0, %v277
    %v279 = vpop.f32.mrb[0].mxu0
    %280 = vmatprep.mubr.f32.mxu0 0.0
    %281 = vmatmul.mubr.f32.gmra.mrb[0].mxu0 %v51
    %v282 = vpop.f32.mrb[0].mxu0
    %v283 = vadd.f32 0.0, %v282
    %v284 = vpop.f32.mrb[0].mxu0
    %285 = vmatprep.mubr.f32.mxu0 0.0
    %286 = vmatmul.mubr.f32.gmra.mrb[0].mxu0 %v52
    %v287 = vpop.f32.mrb[0].mxu0
    %v288 = vadd.f32 0.0, %v287
    %v289 = vpop.f32.mrb[0].mxu0
    %290 = vmatprep.mubr.f32.mxu0 0.0
    %291 = vmatmul.mubr.f32.gmra.mrb[0].mxu0 %v53
    %v292 = vpop.f32.mrb[0].mxu0
    %v293 = vadd.f32 0.0, %v292
    %v294 = vpop.f32.mrb[0].mxu0
    %295 = vmatprep.mubr.f32.mxu0 0.0
    %296 = vmatmul.mubr.f32.gmra.mrb[0].mxu0 %v54
    %v297 = vpop.f32.mrb[0].mxu0
    %v298 = vadd.f32 0.0, %v297
    %v299 = vpop.f32.mrb[0].mxu0
    %300 = vmatprep.mubr.f32.mxu0 0.0
    %301 = vmatmul.mubr.f32.gmra.mrb[0].mxu0 %v55
    %v302 = vpop.f32.mrb[0].mxu0
    %v303 = vadd.f32 0.0, %v302
    %v304 = vpop.f32.mrb[0].mxu0
    %305 = vmatprep.mubr.f32.mxu0 0.0
    %306 = vmatmul.mubr.f32.gmra.mrb[0].mxu0 %v56
    %v307 = vpop.f32.mrb[0].mxu0
    %v308 = vadd.f32 0.0, %v307
    %v309 = vpop.f32.mrb[0].mxu0
    %310 = vmatprep.mubr.f32.mxu0 0.0
    %311 = vmatmul.mubr.f32.gmra.mrb[0].mxu0 %v57
    %v312 = vpop.f32.mrb[0].mxu0
    %v313 = vadd.f32 0.0, %v312
    %v314 = vpop.f32.mrb[0].mxu0
    %315 = vdwg.mxu0
    %v316 = vstv %s24
    %v317 = vmul.f32 %v316, %v26
    %v318 = vmul.f32 %v316, %v27
    %v319 = vmul.f32 %v316, %v28
    %v320 = vmul.f32 %v316, %v29
    %v321 = vmul.f32 %v316, %v30
    %v322 = vmul.f32 %v316, %v31
    %v323 = vmul.f32 %v316, %v32
    %v324 = vmul.f32 %v316, %v33
    %v325 = vmul.f32 %v316, %v34
    %v326 = vmul.f32 %v316, %v35
    %v327 = vmul.f32 %v316, %v36
    %v328 = vmul.f32 %v316, %v37
    %v329 = vmul.f32 %v316, %v38
    %v330 = vmul.f32 %v316, %v39
    %v331 = vmul.f32 %v316, %v40
    %v332 = vmul.f32 %v316, %v41
    %v333 = vmul.f32 %v94, %v238
    %v334 = vmul.f32 %v99, %v243
    %v335 = vmul.f32 %v104, %v248
    %v336 = vmul.f32 %v109, %v253
    %v337 = vmul.f32 %v114, %v258
    %v338 = vmul.f32 %v119, %v263
    %v339 = vmul.f32 %v124, %v268
    %v340 = vmul.f32 %v129, %v273
    %v341 = vmul.f32 %v134, %v278
    %v342 = vmul.f32 %v139, %v283
    %v343 = vmul.f32 %v144, %v288
    %v344 = vmul.f32 %v149, %v293
    %v345 = vmul.f32 %v154, %v298
    %v346 = vmul.f32 %v159, %v303
    %v347 = vmul.f32 %v164, %v308
    %v348 = vmul.f32 %v169, %v313
    %v349 = vadd.f32 %v317, %v333
    %v350 = vadd.f32 %v318, %v334
    %v351 = vadd.f32 %v319, %v335
    %v352 = vadd.f32 %v320, %v336
    %v353 = vadd.f32 %v321, %v337
    %v354 = vadd.f32 %v322, %v338
    %v355 = vadd.f32 %v323, %v339
    %v356 = vadd.f32 %v324, %v340
    %v357 = vadd.f32 %v325, %v341
    %v358 = vadd.f32 %v326, %v342
    %v359 = vadd.f32 %v327, %v343
    %v360 = vadd.f32 %v328, %v344
    %v361 = vadd.f32 %v329, %v345
    %v362 = vadd.f32 %v330, %v346
    %v363 = vadd.f32 %v331, %v347
    %v364 = vadd.f32 %v332, %v348
    %365 = vmatprep.subr.mxu0 0.0
    %366 = vmatpush1.msra.mxu0 %v349
    %367 = vmatprep.subr.mxu0 0.0
    %368 = vmatpush1.msra.mxu0 %v350
    %369 = vmatprep.subr.mxu0 0.0
    %370 = vmatpush1.msra.mxu0 %v351
    %371 = vmatprep.subr.mxu0 0.0
    %372 = vmatpush1.msra.mxu0 %v352
    %373 = vmatprep.subr.mxu0 0.0
    %374 = vmatpush1.msra.mxu0 %v353
    %375 = vmatprep.subr.mxu0 0.0
    %376 = vmatpush1.msra.mxu0 %v354
    %377 = vmatprep.subr.mxu0 0.0
    %378 = vmatpush1.msra.mxu0 %v355
    %379 = vmatprep.subr.mxu0 0.0
    %380 = vmatpush1.msra.mxu0 %v356
    %381 = vmatprep.subr.mxu0 0.0
    %382 = vmatpush1.msra.mxu0 %v357
    %383 = vmatprep.subr.mxu0 0.0
    %384 = vmatpush1.msra.mxu0 %v358
    %385 = vmatprep.subr.mxu0 0.0
    %386 = vmatpush1.msra.mxu0 %v359
    %387 = vmatprep.subr.mxu0 0.0
    %388 = vmatpush1.msra.mxu0 %v360
    %389 = vmatprep.subr.mxu0 0.0
    %390 = vmatpush1.msra.mxu0 %v361
    %391 = vmatprep.subr.mxu0 0.0
    %392 = vmatpush1.msra.mxu0 %v362
    %393 = vmatprep.subr.mxu0 0.0
    %394 = vmatpush1.msra.mxu0 %v363
    %395 = vmatprep.subr.mxu0 0.0
    %396 = vmatpush1.msra.mxu0 %v364
    %397 = vmatprep.subr.mxu0 0.0
    %398 = vmatpush1.msra.mxu0 0.0
    %399 = vmatprep.subr.mxu0 0.0
    %400 = vmatpush1.msra.mxu0 0.0
    %401 = vmatprep.subr.mxu0 0.0
    %402 = vmatpush1.msra.mxu0 0.0
    %403 = vmatprep.subr.mxu0 0.0
    %404 = vmatpush1.msra.mxu0 0.0
    %405 = vmatprep.subr.mxu0 0.0
    %406 = vmatpush1.msra.mxu0 0.0
    %407 = vmatprep.subr.mxu0 0.0
    %408 = vmatpush1.msra.mxu0 0.0
    %409 = vmatprep.subr.mxu0 0.0
    %410 = vmatpush1.msra.mxu0 0.0
    %411 = vmatprep.subr.mxu0 0.0
    %412 = vmatpush1.msra.mxu0 0.0
    %413 = vmatprep.subr.mxu0 0.0
    %414 = vmatpush1.msra.mxu0 0.0
    %415 = vmatprep.subr.mxu0 0.0
    %416 = vmatpush1.msra.mxu0 0.0
    %417 = vmatprep.subr.mxu0 0.0
    %418 = vmatpush1.msra.mxu0 0.0
    %419 = vmatprep.subr.mxu0 0.0
    %420 = vmatpush1.msra.mxu0 0.0
    %421 = vmatprep.subr.mxu0 0.0
    %422 = vmatpush1.msra.mxu0 0.0
    %423 = vmatprep.subr.mxu0 0.0
    %424 = vmatpush1.msra.mxu0 0.0
    %425 = vmatprep.subr.mxu0 0.0
    %426 = vmatpush1.msra.mxu0 0.0
    %427 = vmatprep.subr.mxu0 0.0
    %428 = vmatpush1.msra.mxu0 0.0
    %429 = vmatprep.mubr.f32.mxu0 0.0
    %430 = vmatmul.mubr.f32.gmra.mrb[0].mxu0 %v42
    %v431 = vpop.f32.mrb[0].mxu0
    %v432 = vadd.f32 0.0, %v431
    %v433 = vpop.f32.mrb[0].mxu0
    %434 = vmatprep.mubr.f32.mxu0 0.0
    %435 = vmatmul.mubr.f32.gmra.mrb[0].mxu0 %v43
    %v436 = vpop.f32.mrb[0].mxu0
    %v437 = vadd.f32 0.0, %v436
    %v438 = vpop.f32.mrb[0].mxu0
    %439 = vmatprep.mubr.f32.mxu0 0.0
    %440 = vmatmul.mubr.f32.gmra.mrb[0].mxu0 %v44
    %v441 = vpop.f32.mrb[0].mxu0
    %v442 = vadd.f32 0.0, %v441
    %v443 = vpop.f32.mrb[0].mxu0
    %444 = vmatprep.mubr.f32.mxu0 0.0
    %445 = vmatmul.mubr.f32.gmra.mrb[0].mxu0 %v45
    %v446 = vpop.f32.mrb[0].mxu0
    %v447 = vadd.f32 0.0, %v446
    %v448 = vpop.f32.mrb[0].mxu0
    %449 = vmatprep.mubr.f32.mxu0 0.0
    %450 = vmatmul.mubr.f32.gmra.mrb[0].mxu0 %v46
    %v451 = vpop.f32.mrb[0].mxu0
    %v452 = vadd.f32 0.0, %v451
    %v453 = vpop.f32.mrb[0].mxu0
    %454 = vmatprep.mubr.f32.mxu0 0.0
    %455 = vmatmul.mubr.f32.gmra.mrb[0].mxu0 %v47
    %v456 = vpop.f32.mrb[0].mxu0
    %v457 = vadd.f32 0.0, %v456
    %v458 = vpop.f32.mrb[0].mxu0
    %459 = vmatprep.mubr.f32.mxu0 0.0
    %460 = vmatmul.mubr.f32.gmra.mrb[0].mxu0 %v48
    %v461 = vpop.f32.mrb[0].mxu0
    %v462 = vadd.f32 0.0, %v461
    %v463 = vpop.f32.mrb[0].mxu0
    %464 = vmatprep.mubr.f32.mxu0 0.0
    %465 = vmatmul.mubr.f32.gmra.mrb[0].mxu0 %v49
    %v466 = vpop.f32.mrb[0].mxu0
    %v467 = vadd.f32 0.0, %v466
    %v468 = vpop.f32.mrb[0].mxu0
    %469 = vmatprep.mubr.f32.mxu0 0.0
    %470 = vmatmul.mubr.f32.gmra.mrb[0].mxu0 %v50
    %v471 = vpop.f32.mrb[0].mxu0
    %v472 = vadd.f32 0.0, %v471
    %v473 = vpop.f32.mrb[0].mxu0
    %474 = vmatprep.mubr.f32.mxu0 0.0
    %475 = vmatmul.mubr.f32.gmra.mrb[0].mxu0 %v51
    %v476 = vpop.f32.mrb[0].mxu0
    %v477 = vadd.f32 0.0, %v476
    %v478 = vpop.f32.mrb[0].mxu0
    %479 = vmatprep.mubr.f32.mxu0 0.0
    %480 = vmatmul.mubr.f32.gmra.mrb[0].mxu0 %v52
    %v481 = vpop.f32.mrb[0].mxu0
    %v482 = vadd.f32 0.0, %v481
    %v483 = vpop.f32.mrb[0].mxu0
    %484 = vmatprep.mubr.f32.mxu0 0.0
    %485 = vmatmul.mubr.f32.gmra.mrb[0].mxu0 %v53
    %v486 = vpop.f32.mrb[0].mxu0
    %v487 = vadd.f32 0.0, %v486
    %v488 = vpop.f32.mrb[0].mxu0
    %489 = vmatprep.mubr.f32.mxu0 0.0
    %490 = vmatmul.mubr.f32.gmra.mrb[0].mxu0 %v54
    %v491 = vpop.f32.mrb[0].mxu0
    %v492 = vadd.f32 0.0, %v491
    %v493 = vpop.f32.mrb[0].mxu0
    %494 = vmatprep.mubr.f32.mxu0 0.0
    %495 = vmatmul.mubr.f32.gmra.mrb[0].mxu0 %v55
    %v496 = vpop.f32.mrb[0].mxu0
    %v497 = vadd.f32 0.0, %v496
    %v498 = vpop.f32.mrb[0].mxu0
    %499 = vmatprep.mubr.f32.mxu0 0.0
    %500 = vmatmul.mubr.f32.gmra.mrb[0].mxu0 %v56
    %v501 = vpop.f32.mrb[0].mxu0
    %v502 = vadd.f32 0.0, %v501
    %v503 = vpop.f32.mrb[0].mxu0
    %504 = vmatprep.mubr.f32.mxu0 0.0
    %505 = vmatmul.mubr.f32.gmra.mrb[0].mxu0 %v57
    %v506 = vpop.f32.mrb[0].mxu0
    %v507 = vadd.f32 0.0, %v506
    %v508 = vpop.f32.mrb[0].mxu0
    %509 = vdwg.mxu0
    %v510 = vmul.f32 %v316, %v349
    %v511 = vmul.f32 %v316, %v350
    %v512 = vmul.f32 %v316, %v351
    %v513 = vmul.f32 %v316, %v352
    %v514 = vmul.f32 %v316, %v353
    %v515 = vmul.f32 %v316, %v354
    %v516 = vmul.f32 %v316, %v355
    %v517 = vmul.f32 %v316, %v356
    %v518 = vmul.f32 %v316, %v357
    %v519 = vmul.f32 %v316, %v358
    %v520 = vmul.f32 %v316, %v359
    %v521 = vmul.f32 %v316, %v360
    %v522 = vmul.f32 %v316, %v361
    %v523 = vmul.f32 %v316, %v362
    %v524 = vmul.f32 %v316, %v363
    %v525 = vmul.f32 %v316, %v364
    %v526 = vmul.f32 %v94, %v432
    %v527 = vmul.f32 %v99, %v437
    %v528 = vmul.f32 %v104, %v442
    %v529 = vmul.f32 %v109, %v447
    %v530 = vmul.f32 %v114, %v452
    %v531 = vmul.f32 %v119, %v457
    %v532 = vmul.f32 %v124, %v462
    %v533 = vmul.f32 %v129, %v467
    %v534 = vmul.f32 %v134, %v472
    %v535 = vmul.f32 %v139, %v477
    %v536 = vmul.f32 %v144, %v482
    %v537 = vmul.f32 %v149, %v487
    %v538 = vmul.f32 %v154, %v492
    %v539 = vmul.f32 %v159, %v497
    %v540 = vmul.f32 %v164, %v502
    %v541 = vmul.f32 %v169, %v507
    %v542 = vadd.f32 %v510, %v526
    %v543 = vadd.f32 %v511, %v527
    %v544 = vadd.f32 %v512, %v528
    %v545 = vadd.f32 %v513, %v529
    %v546 = vadd.f32 %v514, %v530
    %v547 = vadd.f32 %v515, %v531
    %v548 = vadd.f32 %v516, %v532
    %v549 = vadd.f32 %v517, %v533
    %v550 = vadd.f32 %v518, %v534
    %v551 = vadd.f32 %v519, %v535
    %v552 = vadd.f32 %v520, %v536
    %v553 = vadd.f32 %v521, %v537
    %v554 = vadd.f32 %v522, %v538
    %v555 = vadd.f32 %v523, %v539
    %v556 = vadd.f32 %v524, %v540
    %v557 = vadd.f32 %v525, %v541
    %558 = vmatprep.subr.mxu0 0.0
    %559 = vmatpush1.msra.mxu0 %v542
    %560 = vmatprep.subr.mxu0 0.0
    %561 = vmatpush1.msra.mxu0 %v543
    %562 = vmatprep.subr.mxu0 0.0
    %563 = vmatpush1.msra.mxu0 %v544
    %564 = vmatprep.subr.mxu0 0.0
    %565 = vmatpush1.msra.mxu0 %v545
    %566 = vmatprep.subr.mxu0 0.0
    %567 = vmatpush1.msra.mxu0 %v546
    %568 = vmatprep.subr.mxu0 0.0
    %569 = vmatpush1.msra.mxu0 %v547
    %570 = vmatprep.subr.mxu0 0.0
    %571 = vmatpush1.msra.mxu0 %v548
    %572 = vmatprep.subr.mxu0 0.0
    %573 = vmatpush1.msra.mxu0 %v549
    %574 = vmatprep.subr.mxu0 0.0
    %575 = vmatpush1.msra.mxu0 %v550
    %576 = vmatprep.subr.mxu0 0.0
    %577 = vmatpush1.msra.mxu0 %v551
    %578 = vmatprep.subr.mxu0 0.0
    %579 = vmatpush1.msra.mxu0 %v552
    %580 = vmatprep.subr.mxu0 0.0
    %581 = vmatpush1.msra.mxu0 %v553
    %582 = vmatprep.subr.mxu0 0.0
    %583 = vmatpush1.msra.mxu0 %v554
    %584 = vmatprep.subr.mxu0 0.0
    %585 = vmatpush1.msra.mxu0 %v555
    %586 = vmatprep.subr.mxu0 0.0
    %587 = vmatpush1.msra.mxu0 %v556
    %588 = vmatprep.subr.mxu0 0.0
    %589 = vmatpush1.msra.mxu0 %v557
    %590 = vmatprep.subr.mxu0 0.0
    %591 = vmatpush1.msra.mxu0 0.0
    %592 = vmatprep.subr.mxu0 0.0
    %593 = vmatpush1.msra.mxu0 0.0
    %594 = vmatprep.subr.mxu0 0.0
    %595 = vmatpush1.msra.mxu0 0.0
    %596 = vmatprep.subr.mxu0 0.0
    %597 = vmatpush1.msra.mxu0 0.0
    %598 = vmatprep.subr.mxu0 0.0
    %599 = vmatpush1.msra.mxu0 0.0
    %600 = vmatprep.subr.mxu0 0.0
    %601 = vmatpush1.msra.mxu0 0.0
    %602 = vmatprep.subr.mxu0 0.0
    %603 = vmatpush1.msra.mxu0 0.0
    %604 = vmatprep.subr.mxu0 0.0
    %605 = vmatpush1.msra.mxu0 0.0
    %606 = vmatprep.subr.mxu0 0.0
    %607 = vmatpush1.msra.mxu0 0.0
    %608 = vmatprep.subr.mxu0 0.0
    %609 = vmatpush1.msra.mxu0 0.0
    %610 = vmatprep.subr.mxu0 0.0
    %611 = vmatpush1.msra.mxu0 0.0
    %612 = vmatprep.subr.mxu0 0.0
    %613 = vmatpush1.msra.mxu0 0.0
    %614 = vmatprep.subr.mxu0 0.0
    %615 = vmatpush1.msra.mxu0 0.0
    %616 = vmatprep.subr.mxu0 0.0
    %617 = vmatpush1.msra.mxu0 0.0
    %618 = vmatprep.subr.mxu0 0.0
    %619 = vmatpush1.msra.mxu0 0.0
    %620 = vmatprep.subr.mxu0 0.0
    %621 = vmatpush1.msra.mxu0 0.0
    %622 = vmatprep.mubr.f32.mxu0 0.0
    %623 = vmatmul.mubr.f32.gmra.mrb[0].mxu0 %v42
    %v624 = vpop.f32.mrb[0].mxu0
    %v625 = vadd.f32 0.0, %v624
    %v626 = vpop.f32.mrb[0].mxu0
    %627 = vmatprep.mubr.f32.mxu0 0.0
    %628 = vmatmul.mubr.f32.gmra.mrb[0].mxu0 %v43
    %v629 = vpop.f32.mrb[0].mxu0
    %v630 = vadd.f32 0.0, %v629
    %v631 = vpop.f32.mrb[0].mxu0
    %632 = vmatprep.mubr.f32.mxu0 0.0
    %633 = vmatmul.mubr.f32.gmra.mrb[0].mxu0 %v44
    %v634 = vpop.f32.mrb[0].mxu0
    %v635 = vadd.f32 0.0, %v634
    %v636 = vpop.f32.mrb[0].mxu0
    %637 = vmatprep.mubr.f32.mxu0 0.0
    %638 = vmatmul.mubr.f32.gmra.mrb[0].mxu0 %v45
    %v639 = vpop.f32.mrb[0].mxu0
    %v640 = vadd.f32 0.0, %v639
    %v641 = vpop.f32.mrb[0].mxu0
    %642 = vmatprep.mubr.f32.mxu0 0.0
    %643 = vmatmul.mubr.f32.gmra.mrb[0].mxu0 %v46
    %v644 = vpop.f32.mrb[0].mxu0
    %v645 = vadd.f32 0.0, %v644
    %v646 = vpop.f32.mrb[0].mxu0
    %647 = vmatprep.mubr.f32.mxu0 0.0
    %648 = vmatmul.mubr.f32.gmra.mrb[0].mxu0 %v47
    %v649 = vpop.f32.mrb[0].mxu0
    %v650 = vadd.f32 0.0, %v649
    %v651 = vpop.f32.mrb[0].mxu0
    %652 = vmatprep.mubr.f32.mxu0 0.0
    %653 = vmatmul.mubr.f32.gmra.mrb[0].mxu0 %v48
    %v654 = vpop.f32.mrb[0].mxu0
    %v655 = vadd.f32 0.0, %v654
    %v656 = vpop.f32.mrb[0].mxu0
    %657 = vmatprep.mubr.f32.mxu0 0.0
    %658 = vmatmul.mubr.f32.gmra.mrb[0].mxu0 %v49
    %v659 = vpop.f32.mrb[0].mxu0
    %v660 = vadd.f32 0.0, %v659
    %v661 = vpop.f32.mrb[0].mxu0
    %662 = vmatprep.mubr.f32.mxu0 0.0
    %663 = vmatmul.mubr.f32.gmra.mrb[0].mxu0 %v50
    %v664 = vpop.f32.mrb[0].mxu0
    %v665 = vadd.f32 0.0, %v664
    %v666 = vpop.f32.mrb[0].mxu0
    %667 = vmatprep.mubr.f32.mxu0 0.0
    %668 = vmatmul.mubr.f32.gmra.mrb[0].mxu0 %v51
    %v669 = vpop.f32.mrb[0].mxu0
    %v670 = vadd.f32 0.0, %v669
    %v671 = vpop.f32.mrb[0].mxu0
    %672 = vmatprep.mubr.f32.mxu0 0.0
    %673 = vmatmul.mubr.f32.gmra.mrb[0].mxu0 %v52
    %v674 = vpop.f32.mrb[0].mxu0
    %v675 = vadd.f32 0.0, %v674
    %v676 = vpop.f32.mrb[0].mxu0
    %677 = vmatprep.mubr.f32.mxu0 0.0
    %678 = vmatmul.mubr.f32.gmra.mrb[0].mxu0 %v53
    %v679 = vpop.f32.mrb[0].mxu0
    %v680 = vadd.f32 0.0, %v679
    %v681 = vpop.f32.mrb[0].mxu0
    %682 = vmatprep.mubr.f32.mxu0 0.0
    %683 = vmatmul.mubr.f32.gmra.mrb[0].mxu0 %v54
    %v684 = vpop.f32.mrb[0].mxu0
    %v685 = vadd.f32 0.0, %v684
    %v686 = vpop.f32.mrb[0].mxu0
    %687 = vmatprep.mubr.f32.mxu0 0.0
    %688 = vmatmul.mubr.f32.gmra.mrb[0].mxu0 %v55
    %v689 = vpop.f32.mrb[0].mxu0
    %v690 = vadd.f32 0.0, %v689
    %v691 = vpop.f32.mrb[0].mxu0
    %692 = vmatprep.mubr.f32.mxu0 0.0
    %693 = vmatmul.mubr.f32.gmra.mrb[0].mxu0 %v56
    %v694 = vpop.f32.mrb[0].mxu0
    %v695 = vadd.f32 0.0, %v694
    %v696 = vpop.f32.mrb[0].mxu0
    %697 = vmatprep.mubr.f32.mxu0 0.0
    %698 = vmatmul.mubr.f32.gmra.mrb[0].mxu0 %v57
    %v699 = vpop.f32.mrb[0].mxu0
    %v700 = vadd.f32 0.0, %v699
    %v701 = vpop.f32.mrb[0].mxu0
    %702 = vdwg.mxu0
    %v703 = vmul.f32 %v316, %v542
    %v704 = vmul.f32 %v316, %v543
    %v705 = vmul.f32 %v316, %v544
    %v706 = vmul.f32 %v316, %v545
    %v707 = vmul.f32 %v316, %v546
    %v708 = vmul.f32 %v316, %v547
    %v709 = vmul.f32 %v316, %v548
    %v710 = vmul.f32 %v316, %v549
    %v711 = vmul.f32 %v316, %v550
    %v712 = vmul.f32 %v316, %v551
    %v713 = vmul.f32 %v316, %v552
    %v714 = vmul.f32 %v316, %v553
    %v715 = vmul.f32 %v316, %v554
    %v716 = vmul.f32 %v316, %v555
    %v717 = vmul.f32 %v316, %v556
    %v718 = vmul.f32 %v316, %v557
    %v719 = vmul.f32 %v94, %v625
    %v720 = vmul.f32 %v99, %v630
    %v721 = vmul.f32 %v104, %v635
    %v722 = vmul.f32 %v109, %v640
    %v723 = vmul.f32 %v114, %v645
    %v724 = vmul.f32 %v119, %v650
    %v725 = vmul.f32 %v124, %v655
    %v726 = vmul.f32 %v129, %v660
    %v727 = vmul.f32 %v134, %v665
    %v728 = vmul.f32 %v139, %v670
    %v729 = vmul.f32 %v144, %v675
    %v730 = vmul.f32 %v149, %v680
    %v731 = vmul.f32 %v154, %v685
    %v732 = vmul.f32 %v159, %v690
    %v733 = vmul.f32 %v164, %v695
    %v734 = vmul.f32 %v169, %v700
    %v735 = vadd.f32 %v703, %v719
    %v736 = vadd.f32 %v704, %v720
    %v737 = vadd.f32 %v705, %v721
    %v738 = vadd.f32 %v706, %v722
    %v739 = vadd.f32 %v707, %v723
    %v740 = vadd.f32 %v708, %v724
    %v741 = vadd.f32 %v709, %v725
    %v742 = vadd.f32 %v710, %v726
    %v743 = vadd.f32 %v711, %v727
    %v744 = vadd.f32 %v712, %v728
    %v745 = vadd.f32 %v713, %v729
    %v746 = vadd.f32 %v714, %v730
    %v747 = vadd.f32 %v715, %v731
    %v748 = vadd.f32 %v716, %v732
    %v749 = vadd.f32 %v717, %v733
    %v750 = vadd.f32 %v718, %v734
    %751 = vmatprep.subr.mxu0 0.0
    %752 = vmatpush1.msra.mxu0 %v735
    %753 = vmatprep.subr.mxu0 0.0
    %754 = vmatpush1.msra.mxu0 %v736
    %755 = vmatprep.subr.mxu0 0.0
    %756 = vmatpush1.msra.mxu0 %v737
    %757 = vmatprep.subr.mxu0 0.0
    %758 = vmatpush1.msra.mxu0 %v738
    %759 = vmatprep.subr.mxu0 0.0
    %760 = vmatpush1.msra.mxu0 %v739
    %761 = vmatprep.subr.mxu0 0.0
    %762 = vmatpush1.msra.mxu0 %v740
    %763 = vmatprep.subr.mxu0 0.0
    %764 = vmatpush1.msra.mxu0 %v741
    %765 = vmatprep.subr.mxu0 0.0
    %766 = vmatpush1.msra.mxu0 %v742
    %767 = vmatprep.subr.mxu0 0.0
    %768 = vmatpush1.msra.mxu0 %v743
    %769 = vmatprep.subr.mxu0 0.0
    %770 = vmatpush1.msra.mxu0 %v744
    %771 = vmatprep.subr.mxu0 0.0
    %772 = vmatpush1.msra.mxu0 %v745
    %773 = vmatprep.subr.mxu0 0.0
    %774 = vmatpush1.msra.mxu0 %v746
    %775 = vmatprep.subr.mxu0 0.0
    %776 = vmatpush1.msra.mxu0 %v747
    %777 = vmatprep.subr.mxu0 0.0
    %778 = vmatpush1.msra.mxu0 %v748
    %779 = vmatprep.subr.mxu0 0.0
    %780 = vmatpush1.msra.mxu0 %v749
    %781 = vmatprep.subr.mxu0 0.0
    %782 = vmatpush1.msra.mxu0 %v750
    %783 = vmatprep.subr.mxu0 0.0
    %784 = vmatpush1.msra.mxu0 0.0
    %785 = vmatprep.subr.mxu0 0.0
    %786 = vmatpush1.msra.mxu0 0.0
    %787 = vmatprep.subr.mxu0 0.0
    %788 = vmatpush1.msra.mxu0 0.0
    %789 = vmatprep.subr.mxu0 0.0
    %790 = vmatpush1.msra.mxu0 0.0
    %791 = vmatprep.subr.mxu0 0.0
    %792 = vmatpush1.msra.mxu0 0.0
    %793 = vmatprep.subr.mxu0 0.0
    %794 = vmatpush1.msra.mxu0 0.0
    %795 = vmatprep.subr.mxu0 0.0
    %796 = vmatpush1.msra.mxu0 0.0
    %797 = vmatprep.subr.mxu0 0.0
    %798 = vmatpush1.msra.mxu0 0.0
    %799 = vmatprep.subr.mxu0 0.0
    %800 = vmatpush1.msra.mxu0 0.0
    %801 = vmatprep.subr.mxu0 0.0
    %802 = vmatpush1.msra.mxu0 0.0
    %803 = vmatprep.subr.mxu0 0.0
    %804 = vmatpush1.msra.mxu0 0.0
    %805 = vmatprep.subr.mxu0 0.0
    %806 = vmatpush1.msra.mxu0 0.0
    %807 = vmatprep.subr.mxu0 0.0
    %808 = vmatpush1.msra.mxu0 0.0
    %809 = vmatprep.subr.mxu0 0.0
    %810 = vmatpush1.msra.mxu0 0.0
    %811 = vmatprep.subr.mxu0 0.0
    %812 = vmatpush1.msra.mxu0 0.0
    %813 = vmatprep.subr.mxu0 0.0
    %814 = vmatpush1.msra.mxu0 0.0
    %815 = vmatprep.mubr.f32.mxu0 0.0
    %816 = vmatmul.mubr.f32.gmra.mrb[0].mxu0 %v42
    %v817 = vpop.f32.mrb[0].mxu0
    %v818 = vadd.f32 0.0, %v817
    %v819 = vpop.f32.mrb[0].mxu0
    %820 = vmatprep.mubr.f32.mxu0 0.0
    %821 = vmatmul.mubr.f32.gmra.mrb[0].mxu0 %v43
    %v822 = vpop.f32.mrb[0].mxu0
    %v823 = vadd.f32 0.0, %v822
    %v824 = vpop.f32.mrb[0].mxu0
    %825 = vmatprep.mubr.f32.mxu0 0.0
    %826 = vmatmul.mubr.f32.gmra.mrb[0].mxu0 %v44
    %v827 = vpop.f32.mrb[0].mxu0
    %v828 = vadd.f32 0.0, %v827
    %v829 = vpop.f32.mrb[0].mxu0
    %830 = vmatprep.mubr.f32.mxu0 0.0
    %831 = vmatmul.mubr.f32.gmra.mrb[0].mxu0 %v45
    %v832 = vpop.f32.mrb[0].mxu0
    %v833 = vadd.f32 0.0, %v832
    %v834 = vpop.f32.mrb[0].mxu0
    %835 = vmatprep.mubr.f32.mxu0 0.0
    %836 = vmatmul.mubr.f32.gmra.mrb[0].mxu0 %v46
    %v837 = vpop.f32.mrb[0].mxu0
    %v838 = vadd.f32 0.0, %v837
    %v839 = vpop.f32.mrb[0].mxu0
    %840 = vmatprep.mubr.f32.mxu0 0.0
    %841 = vmatmul.mubr.f32.gmra.mrb[0].mxu0 %v47
    %v842 = vpop.f32.mrb[0].mxu0
    %v843 = vadd.f32 0.0, %v842
    %v844 = vpop.f32.mrb[0].mxu0
    %845 = vmatprep.mubr.f32.mxu0 0.0
    %846 = vmatmul.mubr.f32.gmra.mrb[0].mxu0 %v48
    %v847 = vpop.f32.mrb[0].mxu0
    %v848 = vadd.f32 0.0, %v847
    %v849 = vpop.f32.mrb[0].mxu0
    %850 = vmatprep.mubr.f32.mxu0 0.0
    %851 = vmatmul.mubr.f32.gmra.mrb[0].mxu0 %v49
    %v852 = vpop.f32.mrb[0].mxu0
    %v853 = vadd.f32 0.0, %v852
    %v854 = vpop.f32.mrb[0].mxu0
    %855 = vmatprep.mubr.f32.mxu0 0.0
    %856 = vmatmul.mubr.f32.gmra.mrb[0].mxu0 %v50
    %v857 = vpop.f32.mrb[0].mxu0
    %v858 = vadd.f32 0.0, %v857
    %v859 = vpop.f32.mrb[0].mxu0
    %860 = vmatprep.mubr.f32.mxu0 0.0
    %861 = vmatmul.mubr.f32.gmra.mrb[0].mxu0 %v51
    %v862 = vpop.f32.mrb[0].mxu0
    %v863 = vadd.f32 0.0, %v862
    %v864 = vpop.f32.mrb[0].mxu0
    %865 = vmatprep.mubr.f32.mxu0 0.0
    %866 = vmatmul.mubr.f32.gmra.mrb[0].mxu0 %v52
    %v867 = vpop.f32.mrb[0].mxu0
    %v868 = vadd.f32 0.0, %v867
    %v869 = vpop.f32.mrb[0].mxu0
    %870 = vmatprep.mubr.f32.mxu0 0.0
    %871 = vmatmul.mubr.f32.gmra.mrb[0].mxu0 %v53
    %v872 = vpop.f32.mrb[0].mxu0
    %v873 = vadd.f32 0.0, %v872
    %v874 = vpop.f32.mrb[0].mxu0
    %875 = vmatprep.mubr.f32.mxu0 0.0
    %876 = vmatmul.mubr.f32.gmra.mrb[0].mxu0 %v54
    %v877 = vpop.f32.mrb[0].mxu0
    %v878 = vadd.f32 0.0, %v877
    %v879 = vpop.f32.mrb[0].mxu0
    %880 = vmatprep.mubr.f32.mxu0 0.0
    %881 = vmatmul.mubr.f32.gmra.mrb[0].mxu0 %v55
    %v882 = vpop.f32.mrb[0].mxu0
    %v883 = vadd.f32 0.0, %v882
    %v884 = vpop.f32.mrb[0].mxu0
    %885 = vmatprep.mubr.f32.mxu0 0.0
    %886 = vmatmul.mubr.f32.gmra.mrb[0].mxu0 %v56
    %v887 = vpop.f32.mrb[0].mxu0
    %v888 = vadd.f32 0.0, %v887
    %v889 = vpop.f32.mrb[0].mxu0
    %890 = vmatprep.mubr.f32.mxu0 0.0
    %891 = vmatmul.mubr.f32.gmra.mrb[0].mxu0 %v57
    %v892 = vpop.f32.mrb[0].mxu0
    %v893 = vadd.f32 0.0, %v892
    %v894 = vpop.f32.mrb[0].mxu0
    %895 = vdwg.mxu0
    %v896 = vmul.f32 %v316, %v735
    %v897 = vmul.f32 %v316, %v736
    %v898 = vmul.f32 %v316, %v737
    %v899 = vmul.f32 %v316, %v738
    %v900 = vmul.f32 %v316, %v739
    %v901 = vmul.f32 %v316, %v740
    %v902 = vmul.f32 %v316, %v741
    %v903 = vmul.f32 %v316, %v742
    %v904 = vmul.f32 %v316, %v743
    %v905 = vmul.f32 %v316, %v744
    %v906 = vmul.f32 %v316, %v745
    %v907 = vmul.f32 %v316, %v746
    %v908 = vmul.f32 %v316, %v747
    %v909 = vmul.f32 %v316, %v748
    %v910 = vmul.f32 %v316, %v749
    %v911 = vmul.f32 %v316, %v750
    %v912 = vmul.f32 %v94, %v818
    %v913 = vmul.f32 %v99, %v823
    %v914 = vmul.f32 %v104, %v828
    %v915 = vmul.f32 %v109, %v833
    %v916 = vmul.f32 %v114, %v838
    %v917 = vmul.f32 %v119, %v843
    %v918 = vmul.f32 %v124, %v848
    %v919 = vmul.f32 %v129, %v853
    %v920 = vmul.f32 %v134, %v858
    %v921 = vmul.f32 %v139, %v863
    %v922 = vmul.f32 %v144, %v868
    %v923 = vmul.f32 %v149, %v873
    %v924 = vmul.f32 %v154, %v878
    %v925 = vmul.f32 %v159, %v883
    %v926 = vmul.f32 %v164, %v888
    %v927 = vmul.f32 %v169, %v893
    %v928 = vadd.f32 %v896, %v912
    %v929 = vadd.f32 %v897, %v913
    %v930 = vadd.f32 %v898, %v914
    %v931 = vadd.f32 %v899, %v915
    %v932 = vadd.f32 %v900, %v916
    %v933 = vadd.f32 %v901, %v917
    %v934 = vadd.f32 %v902, %v918
    %v935 = vadd.f32 %v903, %v919
    %v936 = vadd.f32 %v904, %v920
    %v937 = vadd.f32 %v905, %v921
    %v938 = vadd.f32 %v906, %v922
    %v939 = vadd.f32 %v907, %v923
    %v940 = vadd.f32 %v908, %v924
    %v941 = vadd.f32 %v909, %v925
    %v942 = vadd.f32 %v910, %v926
    %v943 = vadd.f32 %v911, %v927
    %944 = vmatprep.subr.mxu0 0.0
    %945 = vmatpush1.msra.mxu0 %v928
    %946 = vmatprep.subr.mxu0 0.0
    %947 = vmatpush1.msra.mxu0 %v929
    %948 = vmatprep.subr.mxu0 0.0
    %949 = vmatpush1.msra.mxu0 %v930
    %950 = vmatprep.subr.mxu0 0.0
    %951 = vmatpush1.msra.mxu0 %v931
    %952 = vmatprep.subr.mxu0 0.0
    %953 = vmatpush1.msra.mxu0 %v932
    %954 = vmatprep.subr.mxu0 0.0
    %955 = vmatpush1.msra.mxu0 %v933
    %956 = vmatprep.subr.mxu0 0.0
    %957 = vmatpush1.msra.mxu0 %v934
    %958 = vmatprep.subr.mxu0 0.0
    %959 = vmatpush1.msra.mxu0 %v935
    %960 = vmatprep.subr.mxu0 0.0
    %961 = vmatpush1.msra.mxu0 %v936
    %962 = vmatprep.subr.mxu0 0.0
    %963 = vmatpush1.msra.mxu0 %v937
    %964 = vmatprep.subr.mxu0 0.0
    %965 = vmatpush1.msra.mxu0 %v938
    %966 = vmatprep.subr.mxu0 0.0
    %967 = vmatpush1.msra.mxu0 %v939
    %968 = vmatprep.subr.mxu0 0.0
    %969 = vmatpush1.msra.mxu0 %v940
    %970 = vmatprep.subr.mxu0 0.0
    %971 = vmatpush1.msra.mxu0 %v941
    %972 = vmatprep.subr.mxu0 0.0
    %973 = vmatpush1.msra.mxu0 %v942
    %974 = vmatprep.subr.mxu0 0.0
    %975 = vmatpush1.msra.mxu0 %v943
    %976 = vmatprep.subr.mxu0 0.0
    %977 = vmatpush1.msra.mxu0 0.0
    %978 = vmatprep.subr.mxu0 0.0
    %979 = vmatpush1.msra.mxu0 0.0
    %980 = vmatprep.subr.mxu0 0.0
    %981 = vmatpush1.msra.mxu0 0.0
    %982 = vmatprep.subr.mxu0 0.0
    %983 = vmatpush1.msra.mxu0 0.0
    %984 = vmatprep.subr.mxu0 0.0
    %985 = vmatpush1.msra.mxu0 0.0
    %986 = vmatprep.subr.mxu0 0.0
    %987 = vmatpush1.msra.mxu0 0.0
    %988 = vmatprep.subr.mxu0 0.0
    %989 = vmatpush1.msra.mxu0 0.0
    %990 = vmatprep.subr.mxu0 0.0
    %991 = vmatpush1.msra.mxu0 0.0
    %992 = vmatprep.subr.mxu0 0.0
    %993 = vmatpush1.msra.mxu0 0.0
    %994 = vmatprep.subr.mxu0 0.0
    %995 = vmatpush1.msra.mxu0 0.0
    %996 = vmatprep.subr.mxu0 0.0
    %997 = vmatpush1.msra.mxu0 0.0
    %998 = vmatprep.subr.mxu0 0.0
    %999 = vmatpush1.msra.mxu0 0.0
    %1000 = vmatprep.subr.mxu0 0.0
    %1001 = vmatpush1.msra.mxu0 0.0
    %1002 = vmatprep.subr.mxu0 0.0
    %1003 = vmatpush1.msra.mxu0 0.0
    %1004 = vmatprep.subr.mxu0 0.0
    %1005 = vmatpush1.msra.mxu0 0.0
    %1006 = vmatprep.subr.mxu0 0.0
    %1007 = vmatpush1.msra.mxu0 0.0
    %1008 = vmatprep.mubr.f32.mxu0 0.0
    %1009 = vmatmul.mubr.f32.gmra.mrb[0].mxu0 %v42
    %v1010 = vpop.f32.mrb[0].mxu0
    %v1011 = vadd.f32 0.0, %v1010
    %v1012 = vpop.f32.mrb[0].mxu0
    %1013 = vmatprep.mubr.f32.mxu0 0.0
    %1014 = vmatmul.mubr.f32.gmra.mrb[0].mxu0 %v43
    %v1015 = vpop.f32.mrb[0].mxu0
    %v1016 = vadd.f32 0.0, %v1015
    %v1017 = vpop.f32.mrb[0].mxu0
    %1018 = vmatprep.mubr.f32.mxu0 0.0
    %1019 = vmatmul.mubr.f32.gmra.mrb[0].mxu0 %v44
    %v1020 = vpop.f32.mrb[0].mxu0
    %v1021 = vadd.f32 0.0, %v1020
    %v1022 = vpop.f32.mrb[0].mxu0
    %1023 = vmatprep.mubr.f32.mxu0 0.0
    %1024 = vmatmul.mubr.f32.gmra.mrb[0].mxu0 %v45
    %v1025 = vpop.f32.mrb[0].mxu0
    %v1026 = vadd.f32 0.0, %v1025
    %v1027 = vpop.f32.mrb[0].mxu0
    %1028 = vmatprep.mubr.f32.mxu0 0.0
    %1029 = vmatmul.mubr.f32.gmra.mrb[0].mxu0 %v46
    %v1030 = vpop.f32.mrb[0].mxu0
    %v1031 = vadd.f32 0.0, %v1030
    %v1032 = vpop.f32.mrb[0].mxu0
    %1033 = vmatprep.mubr.f32.mxu0 0.0
    %1034 = vmatmul.mubr.f32.gmra.mrb[0].mxu0 %v47
    %v1035 = vpop.f32.mrb[0].mxu0
    %v1036 = vadd.f32 0.0, %v1035
    %v1037 = vpop.f32.mrb[0].mxu0
    %1038 = vmatprep.mubr.f32.mxu0 0.0
    %1039 = vmatmul.mubr.f32.gmra.mrb[0].mxu0 %v48
    %v1040 = vpop.f32.mrb[0].mxu0
    %v1041 = vadd.f32 0.0, %v1040
    %v1042 = vpop.f32.mrb[0].mxu0
    %1043 = vmatprep.mubr.f32.mxu0 0.0
    %1044 = vmatmul.mubr.f32.gmra.mrb[0].mxu0 %v49
    %v1045 = vpop.f32.mrb[0].mxu0
    %v1046 = vadd.f32 0.0, %v1045
    %v1047 = vpop.f32.mrb[0].mxu0
    %1048 = vmatprep.mubr.f32.mxu0 0.0
    %1049 = vmatmul.mubr.f32.gmra.mrb[0].mxu0 %v50
    %v1050 = vpop.f32.mrb[0].mxu0
    %v1051 = vadd.f32 0.0, %v1050
    %v1052 = vpop.f32.mrb[0].mxu0
    %1053 = vmatprep.mubr.f32.mxu0 0.0
    %1054 = vmatmul.mubr.f32.gmra.mrb[0].mxu0 %v51
    %v1055 = vpop.f32.mrb[0].mxu0
    %v1056 = vadd.f32 0.0, %v1055
    %v1057 = vpop.f32.mrb[0].mxu0
    %1058 = vmatprep.mubr.f32.mxu0 0.0
    %1059 = vmatmul.mubr.f32.gmra.mrb[0].mxu0 %v52
    %v1060 = vpop.f32.mrb[0].mxu0
    %v1061 = vadd.f32 0.0, %v1060
    %v1062 = vpop.f32.mrb[0].mxu0
    %1063 = vmatprep.mubr.f32.mxu0 0.0
    %1064 = vmatmul.mubr.f32.gmra.mrb[0].mxu0 %v53
    %v1065 = vpop.f32.mrb[0].mxu0
    %v1066 = vadd.f32 0.0, %v1065
    %v1067 = vpop.f32.mrb[0].mxu0
    %1068 = vmatprep.mubr.f32.mxu0 0.0
    %1069 = vmatmul.mubr.f32.gmra.mrb[0].mxu0 %v54
    %v1070 = vpop.f32.mrb[0].mxu0
    %v1071 = vadd.f32 0.0, %v1070
    %v1072 = vpop.f32.mrb[0].mxu0
    %1073 = vmatprep.mubr.f32.mxu0 0.0
    %1074 = vmatmul.mubr.f32.gmra.mrb[0].mxu0 %v55
    %v1075 = vpop.f32.mrb[0].mxu0
    %v1076 = vadd.f32 0.0, %v1075
    %v1077 = vpop.f32.mrb[0].mxu0
    %1078 = vmatprep.mubr.f32.mxu0 0.0
    %1079 = vmatmul.mubr.f32.gmra.mrb[0].mxu0 %v56
    %v1080 = vpop.f32.mrb[0].mxu0
    %v1081 = vadd.f32 0.0, %v1080
    %v1082 = vpop.f32.mrb[0].mxu0
    %1083 = vmatprep.mubr.f32.mxu0 0.0
    %1084 = vmatmul.mubr.f32.gmra.mrb[0].mxu0 %v57
    %v1085 = vpop.f32.mrb[0].mxu0
    %v1086 = vadd.f32 0.0, %v1085
    %v1087 = vpop.f32.mrb[0].mxu0
    %1088 = vdwg.mxu0
    %v1089 = vmul.f32 %v316, %v928
    %v1090 = vmul.f32 %v316, %v929
    %v1091 = vmul.f32 %v316, %v930
    %v1092 = vmul.f32 %v316, %v931
    %v1093 = vmul.f32 %v316, %v932
    %v1094 = vmul.f32 %v316, %v933
    %v1095 = vmul.f32 %v316, %v934
    %v1096 = vmul.f32 %v316, %v935
    %v1097 = vmul.f32 %v316, %v936
    %v1098 = vmul.f32 %v316, %v937
    %v1099 = vmul.f32 %v316, %v938
    %v1100 = vmul.f32 %v316, %v939
    %v1101 = vmul.f32 %v316, %v940
    %v1102 = vmul.f32 %v316, %v941
    %v1103 = vmul.f32 %v316, %v942
    %v1104 = vmul.f32 %v316, %v943
    %v1105 = vmul.f32 %v94, %v1011
    %v1106 = vmul.f32 %v99, %v1016
    %v1107 = vmul.f32 %v104, %v1021
    %v1108 = vmul.f32 %v109, %v1026
    %v1109 = vmul.f32 %v114, %v1031
    %v1110 = vmul.f32 %v119, %v1036
    %v1111 = vmul.f32 %v124, %v1041
    %v1112 = vmul.f32 %v129, %v1046
    %v1113 = vmul.f32 %v134, %v1051
    %v1114 = vmul.f32 %v139, %v1056
    %v1115 = vmul.f32 %v144, %v1061
    %v1116 = vmul.f32 %v149, %v1066
    %v1117 = vmul.f32 %v154, %v1071
    %v1118 = vmul.f32 %v159, %v1076
    %v1119 = vmul.f32 %v164, %v1081
    %v1120 = vmul.f32 %v169, %v1086
    %v1121 = vadd.f32 %v1089, %v1105
    %v1122 = vadd.f32 %v1090, %v1106
    %v1123 = vadd.f32 %v1091, %v1107
    %v1124 = vadd.f32 %v1092, %v1108
    %v1125 = vadd.f32 %v1093, %v1109
    %v1126 = vadd.f32 %v1094, %v1110
    %v1127 = vadd.f32 %v1095, %v1111
    %v1128 = vadd.f32 %v1096, %v1112
    %v1129 = vadd.f32 %v1097, %v1113
    %v1130 = vadd.f32 %v1098, %v1114
    %v1131 = vadd.f32 %v1099, %v1115
    %v1132 = vadd.f32 %v1100, %v1116
    %v1133 = vadd.f32 %v1101, %v1117
    %v1134 = vadd.f32 %v1102, %v1118
    %v1135 = vadd.f32 %v1103, %v1119
    %v1136 = vadd.f32 %v1104, %v1120
    %1137 = vmatprep.subr.mxu0 0.0
    %1138 = vmatpush1.msra.mxu0 %v1121
    %1139 = vmatprep.subr.mxu0 0.0
    %1140 = vmatpush1.msra.mxu0 %v1122
    %1141 = vmatprep.subr.mxu0 0.0
    %1142 = vmatpush1.msra.mxu0 %v1123
    %1143 = vmatprep.subr.mxu0 0.0
    %1144 = vmatpush1.msra.mxu0 %v1124
    %1145 = vmatprep.subr.mxu0 0.0
    %1146 = vmatpush1.msra.mxu0 %v1125
    %1147 = vmatprep.subr.mxu0 0.0
    %1148 = vmatpush1.msra.mxu0 %v1126
    %1149 = vmatprep.subr.mxu0 0.0
    %1150 = vmatpush1.msra.mxu0 %v1127
    %1151 = vmatprep.subr.mxu0 0.0
    %1152 = vmatpush1.msra.mxu0 %v1128
    %1153 = vmatprep.subr.mxu0 0.0
    %1154 = vmatpush1.msra.mxu0 %v1129
    %1155 = vmatprep.subr.mxu0 0.0
    %1156 = vmatpush1.msra.mxu0 %v1130
    %1157 = vmatprep.subr.mxu0 0.0
    %1158 = vmatpush1.msra.mxu0 %v1131
    %1159 = vmatprep.subr.mxu0 0.0
    %1160 = vmatpush1.msra.mxu0 %v1132
    %1161 = vmatprep.subr.mxu0 0.0
    %1162 = vmatpush1.msra.mxu0 %v1133
    %1163 = vmatprep.subr.mxu0 0.0
    %1164 = vmatpush1.msra.mxu0 %v1134
    %1165 = vmatprep.subr.mxu0 0.0
    %1166 = vmatpush1.msra.mxu0 %v1135
    %1167 = vmatprep.subr.mxu0 0.0
    %1168 = vmatpush1.msra.mxu0 %v1136
    %1169 = vmatprep.subr.mxu0 0.0
    %1170 = vmatpush1.msra.mxu0 0.0
    %1171 = vmatprep.subr.mxu0 0.0
    %1172 = vmatpush1.msra.mxu0 0.0
    %1173 = vmatprep.subr.mxu0 0.0
    %1174 = vmatpush1.msra.mxu0 0.0
    %1175 = vmatprep.subr.mxu0 0.0
    %1176 = vmatpush1.msra.mxu0 0.0
    %1177 = vmatprep.subr.mxu0 0.0
    %1178 = vmatpush1.msra.mxu0 0.0
    %1179 = vmatprep.subr.mxu0 0.0
    %1180 = vmatpush1.msra.mxu0 0.0
    %1181 = vmatprep.subr.mxu0 0.0
    %1182 = vmatpush1.msra.mxu0 0.0
    %1183 = vmatprep.subr.mxu0 0.0
    %1184 = vmatpush1.msra.mxu0 0.0
    %1185 = vmatprep.subr.mxu0 0.0
    %1186 = vmatpush1.msra.mxu0 0.0
    %1187 = vmatprep.subr.mxu0 0.0
    %1188 = vmatpush1.msra.mxu0 0.0
    %1189 = vmatprep.subr.mxu0 0.0
    %1190 = vmatpush1.msra.mxu0 0.0
    %1191 = vmatprep.subr.mxu0 0.0
    %1192 = vmatpush1.msra.mxu0 0.0
    %1193 = vmatprep.subr.mxu0 0.0
    %1194 = vmatpush1.msra.mxu0 0.0
    %1195 = vmatprep.subr.mxu0 0.0
    %1196 = vmatpush1.msra.mxu0 0.0
    %1197 = vmatprep.subr.mxu0 0.0
    %1198 = vmatpush1.msra.mxu0 0.0
    %1199 = vmatprep.subr.mxu0 0.0
    %1200 = vmatpush1.msra.mxu0 0.0
    %1201 = vmatprep.mubr.f32.mxu0 0.0
    %1202 = vmatmul.mubr.f32.gmra.mrb[0].mxu0 %v42
    %v1203 = vpop.f32.mrb[0].mxu0
    %v1204 = vadd.f32 0.0, %v1203
    %v1205 = vpop.f32.mrb[0].mxu0
    %1206 = vmatprep.mubr.f32.mxu0 0.0
    %1207 = vmatmul.mubr.f32.gmra.mrb[0].mxu0 %v43
    %v1208 = vpop.f32.mrb[0].mxu0
    %v1209 = vadd.f32 0.0, %v1208
    %v1210 = vpop.f32.mrb[0].mxu0
    %1211 = vmatprep.mubr.f32.mxu0 0.0
    %1212 = vmatmul.mubr.f32.gmra.mrb[0].mxu0 %v44
    %v1213 = vpop.f32.mrb[0].mxu0
    %v1214 = vadd.f32 0.0, %v1213
    %v1215 = vpop.f32.mrb[0].mxu0
    %1216 = vmatprep.mubr.f32.mxu0 0.0
    %1217 = vmatmul.mubr.f32.gmra.mrb[0].mxu0 %v45
    %v1218 = vpop.f32.mrb[0].mxu0
    %v1219 = vadd.f32 0.0, %v1218
    %v1220 = vpop.f32.mrb[0].mxu0
    %1221 = vmatprep.mubr.f32.mxu0 0.0
    %1222 = vmatmul.mubr.f32.gmra.mrb[0].mxu0 %v46
    %v1223 = vpop.f32.mrb[0].mxu0
    %v1224 = vadd.f32 0.0, %v1223
    %v1225 = vpop.f32.mrb[0].mxu0
    %1226 = vmatprep.mubr.f32.mxu0 0.0
    %1227 = vmatmul.mubr.f32.gmra.mrb[0].mxu0 %v47
    %v1228 = vpop.f32.mrb[0].mxu0
    %v1229 = vadd.f32 0.0, %v1228
    %v1230 = vpop.f32.mrb[0].mxu0
    %1231 = vmatprep.mubr.f32.mxu0 0.0
    %1232 = vmatmul.mubr.f32.gmra.mrb[0].mxu0 %v48
    %v1233 = vpop.f32.mrb[0].mxu0
    %v1234 = vadd.f32 0.0, %v1233
    %v1235 = vpop.f32.mrb[0].mxu0
    %1236 = vmatprep.mubr.f32.mxu0 0.0
    %1237 = vmatmul.mubr.f32.gmra.mrb[0].mxu0 %v49
    %v1238 = vpop.f32.mrb[0].mxu0
    %v1239 = vadd.f32 0.0, %v1238
    %v1240 = vpop.f32.mrb[0].mxu0
    %1241 = vmatprep.mubr.f32.mxu0 0.0
    %1242 = vmatmul.mubr.f32.gmra.mrb[0].mxu0 %v50
    %v1243 = vpop.f32.mrb[0].mxu0
    %v1244 = vadd.f32 0.0, %v1243
    %v1245 = vpop.f32.mrb[0].mxu0
    %1246 = vmatprep.mubr.f32.mxu0 0.0
    %1247 = vmatmul.mubr.f32.gmra.mrb[0].mxu0 %v51
    %v1248 = vpop.f32.mrb[0].mxu0
    %v1249 = vadd.f32 0.0, %v1248
    %v1250 = vpop.f32.mrb[0].mxu0
    %1251 = vmatprep.mubr.f32.mxu0 0.0
    %1252 = vmatmul.mubr.f32.gmra.mrb[0].mxu0 %v52
    %v1253 = vpop.f32.mrb[0].mxu0
    %v1254 = vadd.f32 0.0, %v1253
    %v1255 = vpop.f32.mrb[0].mxu0
    %1256 = vmatprep.mubr.f32.mxu0 0.0
    %1257 = vmatmul.mubr.f32.gmra.mrb[0].mxu0 %v53
    %v1258 = vpop.f32.mrb[0].mxu0
    %v1259 = vadd.f32 0.0, %v1258
    %v1260 = vpop.f32.mrb[0].mxu0
    %1261 = vmatprep.mubr.f32.mxu0 0.0
    %1262 = vmatmul.mubr.f32.gmra.mrb[0].mxu0 %v54
    %v1263 = vpop.f32.mrb[0].mxu0
    %v1264 = vadd.f32 0.0, %v1263
    %v1265 = vpop.f32.mrb[0].mxu0
    %1266 = vmatprep.mubr.f32.mxu0 0.0
    %1267 = vmatmul.mubr.f32.gmra.mrb[0].mxu0 %v55
    %v1268 = vpop.f32.mrb[0].mxu0
    %v1269 = vadd.f32 0.0, %v1268
    %v1270 = vpop.f32.mrb[0].mxu0
    %1271 = vmatprep.mubr.f32.mxu0 0.0
    %1272 = vmatmul.mubr.f32.gmra.mrb[0].mxu0 %v56
    %v1273 = vpop.f32.mrb[0].mxu0
    %v1274 = vadd.f32 0.0, %v1273
    %v1275 = vpop.f32.mrb[0].mxu0
    %1276 = vmatprep.mubr.f32.mxu0 0.0
    %1277 = vmatmul.mubr.f32.gmra.mrb[0].mxu0 %v57
    %v1278 = vpop.f32.mrb[0].mxu0
    %v1279 = vadd.f32 0.0, %v1278
    %v1280 = vpop.f32.mrb[0].mxu0
    %1281 = vdwg.mxu0
    %v1282 = vmul.f32 %v316, %v1121
    %v1283 = vmul.f32 %v316, %v1122
    %v1284 = vmul.f32 %v316, %v1123
    %v1285 = vmul.f32 %v316, %v1124
    %v1286 = vmul.f32 %v316, %v1125
    %v1287 = vmul.f32 %v316, %v1126
    %v1288 = vmul.f32 %v316, %v1127
    %v1289 = vmul.f32 %v316, %v1128
    %v1290 = vmul.f32 %v316, %v1129
    %v1291 = vmul.f32 %v316, %v1130
    %v1292 = vmul.f32 %v316, %v1131
    %v1293 = vmul.f32 %v316, %v1132
    %v1294 = vmul.f32 %v316, %v1133
    %v1295 = vmul.f32 %v316, %v1134
    %v1296 = vmul.f32 %v316, %v1135
    %v1297 = vmul.f32 %v316, %v1136
    %v1298 = vmul.f32 %v94, %v1204
    %v1299 = vmul.f32 %v99, %v1209
    %v1300 = vmul.f32 %v104, %v1214
    %v1301 = vmul.f32 %v109, %v1219
    %v1302 = vmul.f32 %v114, %v1224
    %v1303 = vmul.f32 %v119, %v1229
    %v1304 = vmul.f32 %v124, %v1234
    %v1305 = vmul.f32 %v129, %v1239
    %v1306 = vmul.f32 %v134, %v1244
    %v1307 = vmul.f32 %v139, %v1249
    %v1308 = vmul.f32 %v144, %v1254
    %v1309 = vmul.f32 %v149, %v1259
    %v1310 = vmul.f32 %v154, %v1264
    %v1311 = vmul.f32 %v159, %v1269
    %v1312 = vmul.f32 %v164, %v1274
    %v1313 = vmul.f32 %v169, %v1279
    %v1314 = vadd.f32 %v1282, %v1298
    %v1315 = vadd.f32 %v1283, %v1299
    %v1316 = vadd.f32 %v1284, %v1300
    %v1317 = vadd.f32 %v1285, %v1301
    %v1318 = vadd.f32 %v1286, %v1302
    %v1319 = vadd.f32 %v1287, %v1303
    %v1320 = vadd.f32 %v1288, %v1304
    %v1321 = vadd.f32 %v1289, %v1305
    %v1322 = vadd.f32 %v1290, %v1306
    %v1323 = vadd.f32 %v1291, %v1307
    %v1324 = vadd.f32 %v1292, %v1308
    %v1325 = vadd.f32 %v1293, %v1309
    %v1326 = vadd.f32 %v1294, %v1310
    %v1327 = vadd.f32 %v1295, %v1311
    %v1328 = vadd.f32 %v1296, %v1312
    %v1329 = vadd.f32 %v1297, %v1313
    %1330 = vmatprep.subr.mxu0 0.0
    %1331 = vmatpush1.msra.mxu0 %v1314
    %1332 = vmatprep.subr.mxu0 0.0
    %1333 = vmatpush1.msra.mxu0 %v1315
    %1334 = vmatprep.subr.mxu0 0.0
    %1335 = vmatpush1.msra.mxu0 %v1316
    %1336 = vmatprep.subr.mxu0 0.0
    %1337 = vmatpush1.msra.mxu0 %v1317
    %1338 = vmatprep.subr.mxu0 0.0
    %1339 = vmatpush1.msra.mxu0 %v1318
    %1340 = vmatprep.subr.mxu0 0.0
    %1341 = vmatpush1.msra.mxu0 %v1319
    %1342 = vmatprep.subr.mxu0 0.0
    %1343 = vmatpush1.msra.mxu0 %v1320
    %1344 = vmatprep.subr.mxu0 0.0
    %1345 = vmatpush1.msra.mxu0 %v1321
    %1346 = vmatprep.subr.mxu0 0.0
    %1347 = vmatpush1.msra.mxu0 %v1322
    %1348 = vmatprep.subr.mxu0 0.0
    %1349 = vmatpush1.msra.mxu0 %v1323
    %1350 = vmatprep.subr.mxu0 0.0
    %1351 = vmatpush1.msra.mxu0 %v1324
    %1352 = vmatprep.subr.mxu0 0.0
    %1353 = vmatpush1.msra.mxu0 %v1325
    %1354 = vmatprep.subr.mxu0 0.0
    %1355 = vmatpush1.msra.mxu0 %v1326
    %1356 = vmatprep.subr.mxu0 0.0
    %1357 = vmatpush1.msra.mxu0 %v1327
    %1358 = vmatprep.subr.mxu0 0.0
    %1359 = vmatpush1.msra.mxu0 %v1328
    %1360 = vmatprep.subr.mxu0 0.0
    %1361 = vmatpush1.msra.mxu0 %v1329
    %1362 = vmatprep.subr.mxu0 0.0
    %1363 = vmatpush1.msra.mxu0 0.0
    %1364 = vmatprep.subr.mxu0 0.0
    %1365 = vmatpush1.msra.mxu0 0.0
    %1366 = vmatprep.subr.mxu0 0.0
    %1367 = vmatpush1.msra.mxu0 0.0
    %1368 = vmatprep.subr.mxu0 0.0
    %1369 = vmatpush1.msra.mxu0 0.0
    %1370 = vmatprep.subr.mxu0 0.0
    %1371 = vmatpush1.msra.mxu0 0.0
    %1372 = vmatprep.subr.mxu0 0.0
    %1373 = vmatpush1.msra.mxu0 0.0
    %1374 = vmatprep.subr.mxu0 0.0
    %1375 = vmatpush1.msra.mxu0 0.0
    %1376 = vmatprep.subr.mxu0 0.0
    %1377 = vmatpush1.msra.mxu0 0.0
    %1378 = vmatprep.subr.mxu0 0.0
    %1379 = vmatpush1.msra.mxu0 0.0
    %1380 = vmatprep.subr.mxu0 0.0
    %1381 = vmatpush1.msra.mxu0 0.0
    %1382 = vmatprep.subr.mxu0 0.0
    %1383 = vmatpush1.msra.mxu0 0.0
    %1384 = vmatprep.subr.mxu0 0.0
    %1385 = vmatpush1.msra.mxu0 0.0
    %1386 = vmatprep.subr.mxu0 0.0
    %1387 = vmatpush1.msra.mxu0 0.0
    %1388 = vmatprep.subr.mxu0 0.0
    %1389 = vmatpush1.msra.mxu0 0.0
    %1390 = vmatprep.subr.mxu0 0.0
    %1391 = vmatpush1.msra.mxu0 0.0
    %1392 = vmatprep.subr.mxu0 0.0
    %1393 = vmatpush1.msra.mxu0 0.0
    %1394 = vmatprep.mubr.f32.mxu0 0.0
    %1395 = vmatmul.mubr.f32.gmra.mrb[0].mxu0 %v42
    %v1396 = vpop.f32.mrb[0].mxu0
    %v1397 = vadd.f32 0.0, %v1396
    %v1398 = vpop.f32.mrb[0].mxu0
    %1399 = vmatprep.mubr.f32.mxu0 0.0
    %1400 = vmatmul.mubr.f32.gmra.mrb[0].mxu0 %v43
    %v1401 = vpop.f32.mrb[0].mxu0
    %v1402 = vadd.f32 0.0, %v1401
    %v1403 = vpop.f32.mrb[0].mxu0
    %1404 = vmatprep.mubr.f32.mxu0 0.0
    %1405 = vmatmul.mubr.f32.gmra.mrb[0].mxu0 %v44
    %v1406 = vpop.f32.mrb[0].mxu0
    %v1407 = vadd.f32 0.0, %v1406
    %v1408 = vpop.f32.mrb[0].mxu0
    %1409 = vmatprep.mubr.f32.mxu0 0.0
    %1410 = vmatmul.mubr.f32.gmra.mrb[0].mxu0 %v45
    %v1411 = vpop.f32.mrb[0].mxu0
    %v1412 = vadd.f32 0.0, %v1411
    %v1413 = vpop.f32.mrb[0].mxu0
    %1414 = vmatprep.mubr.f32.mxu0 0.0
    %1415 = vmatmul.mubr.f32.gmra.mrb[0].mxu0 %v46
    %v1416 = vpop.f32.mrb[0].mxu0
    %v1417 = vadd.f32 0.0, %v1416
    %v1418 = vpop.f32.mrb[0].mxu0
    %1419 = vmatprep.mubr.f32.mxu0 0.0
    %1420 = vmatmul.mubr.f32.gmra.mrb[0].mxu0 %v47
    %v1421 = vpop.f32.mrb[0].mxu0
    %v1422 = vadd.f32 0.0, %v1421
    %v1423 = vpop.f32.mrb[0].mxu0
    %1424 = vmatprep.mubr.f32.mxu0 0.0
    %1425 = vmatmul.mubr.f32.gmra.mrb[0].mxu0 %v48
    %v1426 = vpop.f32.mrb[0].mxu0
    %v1427 = vadd.f32 0.0, %v1426
    %v1428 = vpop.f32.mrb[0].mxu0
    %1429 = vmatprep.mubr.f32.mxu0 0.0
    %1430 = vmatmul.mubr.f32.gmra.mrb[0].mxu0 %v49
    %v1431 = vpop.f32.mrb[0].mxu0
    %v1432 = vadd.f32 0.0, %v1431
    %v1433 = vpop.f32.mrb[0].mxu0
    %1434 = vmatprep.mubr.f32.mxu0 0.0
    %1435 = vmatmul.mubr.f32.gmra.mrb[0].mxu0 %v50
    %v1436 = vpop.f32.mrb[0].mxu0
    %v1437 = vadd.f32 0.0, %v1436
    %v1438 = vpop.f32.mrb[0].mxu0
    %1439 = vmatprep.mubr.f32.mxu0 0.0
    %1440 = vmatmul.mubr.f32.gmra.mrb[0].mxu0 %v51
    %v1441 = vpop.f32.mrb[0].mxu0
    %v1442 = vadd.f32 0.0, %v1441
    %v1443 = vpop.f32.mrb[0].mxu0
    %1444 = vmatprep.mubr.f32.mxu0 0.0
    %1445 = vmatmul.mubr.f32.gmra.mrb[0].mxu0 %v52
    %v1446 = vpop.f32.mrb[0].mxu0
    %v1447 = vadd.f32 0.0, %v1446
    %v1448 = vpop.f32.mrb[0].mxu0
    %1449 = vmatprep.mubr.f32.mxu0 0.0
    %1450 = vmatmul.mubr.f32.gmra.mrb[0].mxu0 %v53
    %v1451 = vpop.f32.mrb[0].mxu0
    %v1452 = vadd.f32 0.0, %v1451
    %v1453 = vpop.f32.mrb[0].mxu0
    %1454 = vmatprep.mubr.f32.mxu0 0.0
    %1455 = vmatmul.mubr.f32.gmra.mrb[0].mxu0 %v54
    %v1456 = vpop.f32.mrb[0].mxu0
    %v1457 = vadd.f32 0.0, %v1456
    %v1458 = vpop.f32.mrb[0].mxu0
    %1459 = vmatprep.mubr.f32.mxu0 0.0
    %1460 = vmatmul.mubr.f32.gmra.mrb[0].mxu0 %v55
    %v1461 = vpop.f32.mrb[0].mxu0
    %v1462 = vadd.f32 0.0, %v1461
    %v1463 = vpop.f32.mrb[0].mxu0
    %1464 = vmatprep.mubr.f32.mxu0 0.0
    %1465 = vmatmul.mubr.f32.gmra.mrb[0].mxu0 %v56
    %v1466 = vpop.f32.mrb[0].mxu0
    %v1467 = vadd.f32 0.0, %v1466
    %v1468 = vpop.f32.mrb[0].mxu0
    %1469 = vmatprep.mubr.f32.mxu0 0.0
    %1470 = vmatmul.mubr.f32.gmra.mrb[0].mxu0 %v57
    %v1471 = vpop.f32.mrb[0].mxu0
    %v1472 = vadd.f32 0.0, %v1471
    %v1473 = vpop.f32.mrb[0].mxu0
    %1474 = vdwg.mxu0
    %v1475 = vmul.f32 %v316, %v1314
    %v1476 = vmul.f32 %v316, %v1315
    %v1477 = vmul.f32 %v316, %v1316
    %v1478 = vmul.f32 %v316, %v1317
    %v1479 = vmul.f32 %v316, %v1318
    %v1480 = vmul.f32 %v316, %v1319
    %v1481 = vmul.f32 %v316, %v1320
    %v1482 = vmul.f32 %v316, %v1321
    %v1483 = vmul.f32 %v316, %v1322
    %v1484 = vmul.f32 %v316, %v1323
    %v1485 = vmul.f32 %v316, %v1324
    %v1486 = vmul.f32 %v316, %v1325
    %v1487 = vmul.f32 %v316, %v1326
    %v1488 = vmul.f32 %v316, %v1327
    %v1489 = vmul.f32 %v316, %v1328
    %v1490 = vmul.f32 %v316, %v1329
    %v1491 = vmul.f32 %v94, %v1397
    %v1492 = vmul.f32 %v99, %v1402
    %v1493 = vmul.f32 %v104, %v1407
    %v1494 = vmul.f32 %v109, %v1412
    %v1495 = vmul.f32 %v114, %v1417
    %v1496 = vmul.f32 %v119, %v1422
    %v1497 = vmul.f32 %v124, %v1427
    %v1498 = vmul.f32 %v129, %v1432
    %v1499 = vmul.f32 %v134, %v1437
    %v1500 = vmul.f32 %v139, %v1442
    %v1501 = vmul.f32 %v144, %v1447
    %v1502 = vmul.f32 %v149, %v1452
    %v1503 = vmul.f32 %v154, %v1457
    %v1504 = vmul.f32 %v159, %v1462
    %v1505 = vmul.f32 %v164, %v1467
    %v1506 = vmul.f32 %v169, %v1472
    %v1507 = vadd.f32 %v1475, %v1491
    %v1508 = vadd.f32 %v1476, %v1492
    %v1509 = vadd.f32 %v1477, %v1493
    %v1510 = vadd.f32 %v1478, %v1494
    %v1511 = vadd.f32 %v1479, %v1495
    %v1512 = vadd.f32 %v1480, %v1496
    %v1513 = vadd.f32 %v1481, %v1497
    %v1514 = vadd.f32 %v1482, %v1498
    %v1515 = vadd.f32 %v1483, %v1499
    %v1516 = vadd.f32 %v1484, %v1500
    %v1517 = vadd.f32 %v1485, %v1501
    %v1518 = vadd.f32 %v1486, %v1502
    %v1519 = vadd.f32 %v1487, %v1503
    %v1520 = vadd.f32 %v1488, %v1504
    %v1521 = vadd.f32 %v1489, %v1505
    %v1522 = vadd.f32 %v1490, %v1506
    %1523 = vmatprep.subr.mxu0 0.0
    %1524 = vmatpush1.msra.mxu0 %v1507
    %1525 = vmatprep.subr.mxu0 0.0
    %1526 = vmatpush1.msra.mxu0 %v1508
    %1527 = vmatprep.subr.mxu0 0.0
    %1528 = vmatpush1.msra.mxu0 %v1509
    %1529 = vmatprep.subr.mxu0 0.0
    %1530 = vmatpush1.msra.mxu0 %v1510
    %1531 = vmatprep.subr.mxu0 0.0
    %1532 = vmatpush1.msra.mxu0 %v1511
    %1533 = vmatprep.subr.mxu0 0.0
    %1534 = vmatpush1.msra.mxu0 %v1512
    %1535 = vmatprep.subr.mxu0 0.0
    %1536 = vmatpush1.msra.mxu0 %v1513
    %1537 = vmatprep.subr.mxu0 0.0
    %1538 = vmatpush1.msra.mxu0 %v1514
    %1539 = vmatprep.subr.mxu0 0.0
    %1540 = vmatpush1.msra.mxu0 %v1515
    %1541 = vmatprep.subr.mxu0 0.0
    %1542 = vmatpush1.msra.mxu0 %v1516
    %1543 = vmatprep.subr.mxu0 0.0
    %1544 = vmatpush1.msra.mxu0 %v1517
    %1545 = vmatprep.subr.mxu0 0.0
    %1546 = vmatpush1.msra.mxu0 %v1518
    %1547 = vmatprep.subr.mxu0 0.0
    %1548 = vmatpush1.msra.mxu0 %v1519
    %1549 = vmatprep.subr.mxu0 0.0
    %1550 = vmatpush1.msra.mxu0 %v1520
    %1551 = vmatprep.subr.mxu0 0.0
    %1552 = vmatpush1.msra.mxu0 %v1521
    %1553 = vmatprep.subr.mxu0 0.0
    %1554 = vmatpush1.msra.mxu0 %v1522
    %1555 = vmatprep.subr.mxu0 0.0
    %1556 = vmatpush1.msra.mxu0 0.0
    %1557 = vmatprep.subr.mxu0 0.0
    %1558 = vmatpush1.msra.mxu0 0.0
    %1559 = vmatprep.subr.mxu0 0.0
    %1560 = vmatpush1.msra.mxu0 0.0
    %1561 = vmatprep.subr.mxu0 0.0
    %1562 = vmatpush1.msra.mxu0 0.0
    %1563 = vmatprep.subr.mxu0 0.0
    %1564 = vmatpush1.msra.mxu0 0.0
    %1565 = vmatprep.subr.mxu0 0.0
    %1566 = vmatpush1.msra.mxu0 0.0
    %1567 = vmatprep.subr.mxu0 0.0
    %1568 = vmatpush1.msra.mxu0 0.0
    %1569 = vmatprep.subr.mxu0 0.0
    %1570 = vmatpush1.msra.mxu0 0.0
    %1571 = vmatprep.subr.mxu0 0.0
    %1572 = vmatpush1.msra.mxu0 0.0
    %1573 = vmatprep.subr.mxu0 0.0
    %1574 = vmatpush1.msra.mxu0 0.0
    %1575 = vmatprep.subr.mxu0 0.0
    %1576 = vmatpush1.msra.mxu0 0.0
    %1577 = vmatprep.subr.mxu0 0.0
    %1578 = vmatpush1.msra.mxu0 0.0
    %1579 = vmatprep.subr.mxu0 0.0
    %1580 = vmatpush1.msra.mxu0 0.0
    %1581 = vmatprep.subr.mxu0 0.0
    %1582 = vmatpush1.msra.mxu0 0.0
    %1583 = vmatprep.subr.mxu0 0.0
    %1584 = vmatpush1.msra.mxu0 0.0
    %1585 = vmatprep.subr.mxu0 0.0
    %1586 = vmatpush1.msra.mxu0 0.0
    %1587 = vmatprep.mubr.f32.mxu0 0.0
    %1588 = vmatmul.mubr.f32.gmra.mrb[0].mxu0 %v42
    %v1589 = vpop.f32.mrb[0].mxu0
    %v1590 = vadd.f32 0.0, %v1589
    %v1591 = vpop.f32.mrb[0].mxu0
    %1592 = vmatprep.mubr.f32.mxu0 0.0
    %1593 = vmatmul.mubr.f32.gmra.mrb[0].mxu0 %v43
    %v1594 = vpop.f32.mrb[0].mxu0
    %v1595 = vadd.f32 0.0, %v1594
    %v1596 = vpop.f32.mrb[0].mxu0
    %1597 = vmatprep.mubr.f32.mxu0 0.0
    %1598 = vmatmul.mubr.f32.gmra.mrb[0].mxu0 %v44
    %v1599 = vpop.f32.mrb[0].mxu0
    %v1600 = vadd.f32 0.0, %v1599
    %v1601 = vpop.f32.mrb[0].mxu0
    %1602 = vmatprep.mubr.f32.mxu0 0.0
    %1603 = vmatmul.mubr.f32.gmra.mrb[0].mxu0 %v45
    %v1604 = vpop.f32.mrb[0].mxu0
    %v1605 = vadd.f32 0.0, %v1604
    %v1606 = vpop.f32.mrb[0].mxu0
    %1607 = vmatprep.mubr.f32.mxu0 0.0
    %1608 = vmatmul.mubr.f32.gmra.mrb[0].mxu0 %v46
    %v1609 = vpop.f32.mrb[0].mxu0
    %v1610 = vadd.f32 0.0, %v1609
    %v1611 = vpop.f32.mrb[0].mxu0
    %1612 = vmatprep.mubr.f32.mxu0 0.0
    %1613 = vmatmul.mubr.f32.gmra.mrb[0].mxu0 %v47
    %v1614 = vpop.f32.mrb[0].mxu0
    %v1615 = vadd.f32 0.0, %v1614
    %v1616 = vpop.f32.mrb[0].mxu0
    %1617 = vmatprep.mubr.f32.mxu0 0.0
    %1618 = vmatmul.mubr.f32.gmra.mrb[0].mxu0 %v48
    %v1619 = vpop.f32.mrb[0].mxu0
    %v1620 = vadd.f32 0.0, %v1619
    %v1621 = vpop.f32.mrb[0].mxu0
    %1622 = vmatprep.mubr.f32.mxu0 0.0
    %1623 = vmatmul.mubr.f32.gmra.mrb[0].mxu0 %v49
    %v1624 = vpop.f32.mrb[0].mxu0
    %v1625 = vadd.f32 0.0, %v1624
    %v1626 = vpop.f32.mrb[0].mxu0
    %1627 = vmatprep.mubr.f32.mxu0 0.0
    %1628 = vmatmul.mubr.f32.gmra.mrb[0].mxu0 %v50
    %v1629 = vpop.f32.mrb[0].mxu0
    %v1630 = vadd.f32 0.0, %v1629
    %v1631 = vpop.f32.mrb[0].mxu0
    %1632 = vmatprep.mubr.f32.mxu0 0.0
    %1633 = vmatmul.mubr.f32.gmra.mrb[0].mxu0 %v51
    %v1634 = vpop.f32.mrb[0].mxu0
    %v1635 = vadd.f32 0.0, %v1634
    %v1636 = vpop.f32.mrb[0].mxu0
    %1637 = vmatprep.mubr.f32.mxu0 0.0
    %1638 = vmatmul.mubr.f32.gmra.mrb[0].mxu0 %v52
    %v1639 = vpop.f32.mrb[0].mxu0
    %v1640 = vadd.f32 0.0, %v1639
    %v1641 = vpop.f32.mrb[0].mxu0
    %1642 = vmatprep.mubr.f32.mxu0 0.0
    %1643 = vmatmul.mubr.f32.gmra.mrb[0].mxu0 %v53
    %v1644 = vpop.f32.mrb[0].mxu0
    %v1645 = vadd.f32 0.0, %v1644
    %v1646 = vpop.f32.mrb[0].mxu0
    %1647 = vmatprep.mubr.f32.mxu0 0.0
    %1648 = vmatmul.mubr.f32.gmra.mrb[0].mxu0 %v54
    %v1649 = vpop.f32.mrb[0].mxu0
    %v1650 = vadd.f32 0.0, %v1649
    %v1651 = vpop.f32.mrb[0].mxu0
    %1652 = vmatprep.mubr.f32.mxu0 0.0
    %1653 = vmatmul.mubr.f32.gmra.mrb[0].mxu0 %v55
    %v1654 = vpop.f32.mrb[0].mxu0
    %v1655 = vadd.f32 0.0, %v1654
    %v1656 = vpop.f32.mrb[0].mxu0
    %1657 = vmatprep.mubr.f32.mxu0 0.0
    %1658 = vmatmul.mubr.f32.gmra.mrb[0].mxu0 %v56
    %v1659 = vpop.f32.mrb[0].mxu0
    %v1660 = vadd.f32 0.0, %v1659
    %v1661 = vpop.f32.mrb[0].mxu0
    %1662 = vmatprep.mubr.f32.mxu0 0.0
    %1663 = vmatmul.mubr.f32.gmra.mrb[0].mxu0 %v57
    %v1664 = vpop.f32.mrb[0].mxu0
    %v1665 = vadd.f32 0.0, %v1664
    %v1666 = vpop.f32.mrb[0].mxu0
    %1667 = vdwg.mxu0
    %v1668 = vmul.f32 %v316, %v1507
    %v1669 = vmul.f32 %v316, %v1508
    %v1670 = vmul.f32 %v316, %v1509
    %v1671 = vmul.f32 %v316, %v1510
    %v1672 = vmul.f32 %v316, %v1511
    %v1673 = vmul.f32 %v316, %v1512
    %v1674 = vmul.f32 %v316, %v1513
    %v1675 = vmul.f32 %v316, %v1514
    %v1676 = vmul.f32 %v316, %v1515
    %v1677 = vmul.f32 %v316, %v1516
    %v1678 = vmul.f32 %v316, %v1517
    %v1679 = vmul.f32 %v316, %v1518
    %v1680 = vmul.f32 %v316, %v1519
    %v1681 = vmul.f32 %v316, %v1520
    %v1682 = vmul.f32 %v316, %v1521
    %v1683 = vmul.f32 %v316, %v1522
    %v1684 = vmul.f32 %v94, %v1590
    %v1685 = vmul.f32 %v99, %v1595
    %v1686 = vmul.f32 %v104, %v1600
    %v1687 = vmul.f32 %v109, %v1605
    %v1688 = vmul.f32 %v114, %v1610
    %v1689 = vmul.f32 %v119, %v1615
    %v1690 = vmul.f32 %v124, %v1620
    %v1691 = vmul.f32 %v129, %v1625
    %v1692 = vmul.f32 %v134, %v1630
    %v1693 = vmul.f32 %v139, %v1635
    %v1694 = vmul.f32 %v144, %v1640
    %v1695 = vmul.f32 %v149, %v1645
    %v1696 = vmul.f32 %v154, %v1650
    %v1697 = vmul.f32 %v159, %v1655
    %v1698 = vmul.f32 %v164, %v1660
    %v1699 = vmul.f32 %v169, %v1665
    %v1700 = vadd.f32 %v1668, %v1684
    %v1701 = vadd.f32 %v1669, %v1685
    %v1702 = vadd.f32 %v1670, %v1686
    %v1703 = vadd.f32 %v1671, %v1687
    %v1704 = vadd.f32 %v1672, %v1688
    %v1705 = vadd.f32 %v1673, %v1689
    %v1706 = vadd.f32 %v1674, %v1690
    %v1707 = vadd.f32 %v1675, %v1691
    %v1708 = vadd.f32 %v1676, %v1692
    %v1709 = vadd.f32 %v1677, %v1693
    %v1710 = vadd.f32 %v1678, %v1694
    %v1711 = vadd.f32 %v1679, %v1695
    %v1712 = vadd.f32 %v1680, %v1696
    %v1713 = vadd.f32 %v1681, %v1697
    %v1714 = vadd.f32 %v1682, %v1698
    %v1715 = vadd.f32 %v1683, %v1699
    %1716 = vmatprep.subr.mxu0 0.0
    %1717 = vmatpush1.msra.mxu0 %v1700
    %1718 = vmatprep.subr.mxu0 0.0
    %1719 = vmatpush1.msra.mxu0 %v1701
    %1720 = vmatprep.subr.mxu0 0.0
    %1721 = vmatpush1.msra.mxu0 %v1702
    %1722 = vmatprep.subr.mxu0 0.0
    %1723 = vmatpush1.msra.mxu0 %v1703
    %1724 = vmatprep.subr.mxu0 0.0
    %1725 = vmatpush1.msra.mxu0 %v1704
    %1726 = vmatprep.subr.mxu0 0.0
    %1727 = vmatpush1.msra.mxu0 %v1705
    %1728 = vmatprep.subr.mxu0 0.0
    %1729 = vmatpush1.msra.mxu0 %v1706
    %1730 = vmatprep.subr.mxu0 0.0
    %1731 = vmatpush1.msra.mxu0 %v1707
    %1732 = vmatprep.subr.mxu0 0.0
    %1733 = vmatpush1.msra.mxu0 %v1708
    %1734 = vmatprep.subr.mxu0 0.0
    %1735 = vmatpush1.msra.mxu0 %v1709
    %1736 = vmatprep.subr.mxu0 0.0
    %1737 = vmatpush1.msra.mxu0 %v1710
    %1738 = vmatprep.subr.mxu0 0.0
    %1739 = vmatpush1.msra.mxu0 %v1711
    %1740 = vmatprep.subr.mxu0 0.0
    %1741 = vmatpush1.msra.mxu0 %v1712
    %1742 = vmatprep.subr.mxu0 0.0
    %1743 = vmatpush1.msra.mxu0 %v1713
    %1744 = vmatprep.subr.mxu0 0.0
    %1745 = vmatpush1.msra.mxu0 %v1714
    %1746 = vmatprep.subr.mxu0 0.0
    %1747 = vmatpush1.msra.mxu0 %v1715
    %1748 = vmatprep.subr.mxu0 0.0
    %1749 = vmatpush1.msra.mxu0 0.0
    %1750 = vmatprep.subr.mxu0 0.0
    %1751 = vmatpush1.msra.mxu0 0.0
    %1752 = vmatprep.subr.mxu0 0.0
    %1753 = vmatpush1.msra.mxu0 0.0
    %1754 = vmatprep.subr.mxu0 0.0
    %1755 = vmatpush1.msra.mxu0 0.0
    %1756 = vmatprep.subr.mxu0 0.0
    %1757 = vmatpush1.msra.mxu0 0.0
    %1758 = vmatprep.subr.mxu0 0.0
    %1759 = vmatpush1.msra.mxu0 0.0
    %1760 = vmatprep.subr.mxu0 0.0
    %1761 = vmatpush1.msra.mxu0 0.0
    %1762 = vmatprep.subr.mxu0 0.0
    %1763 = vmatpush1.msra.mxu0 0.0
    %1764 = vmatprep.subr.mxu0 0.0
    %1765 = vmatpush1.msra.mxu0 0.0
    %1766 = vmatprep.subr.mxu0 0.0
    %1767 = vmatpush1.msra.mxu0 0.0
    %1768 = vmatprep.subr.mxu0 0.0
    %1769 = vmatpush1.msra.mxu0 0.0
    %1770 = vmatprep.subr.mxu0 0.0
    %1771 = vmatpush1.msra.mxu0 0.0
    %1772 = vmatprep.subr.mxu0 0.0
    %1773 = vmatpush1.msra.mxu0 0.0
    %1774 = vmatprep.subr.mxu0 0.0
    %1775 = vmatpush1.msra.mxu0 0.0
    %1776 = vmatprep.subr.mxu0 0.0
    %1777 = vmatpush1.msra.mxu0 0.0
    %1778 = vmatprep.subr.mxu0 0.0
    %1779 = vmatpush1.msra.mxu0 0.0
    %1780 = vmatprep.mubr.f32.mxu0 0.0
    %1781 = vmatmul.mubr.f32.gmra.mrb[0].mxu0 %v42
    %v1782 = vpop.f32.mrb[0].mxu0
    %v1783 = vadd.f32 0.0, %v1782
    %v1784 = vpop.f32.mrb[0].mxu0
    %1785 = vmatprep.mubr.f32.mxu0 0.0
    %1786 = vmatmul.mubr.f32.gmra.mrb[0].mxu0 %v43
    %v1787 = vpop.f32.mrb[0].mxu0
    %v1788 = vadd.f32 0.0, %v1787
    %v1789 = vpop.f32.mrb[0].mxu0
    %1790 = vmatprep.mubr.f32.mxu0 0.0
    %1791 = vmatmul.mubr.f32.gmra.mrb[0].mxu0 %v44
    %v1792 = vpop.f32.mrb[0].mxu0
    %v1793 = vadd.f32 0.0, %v1792
    %v1794 = vpop.f32.mrb[0].mxu0
    %1795 = vmatprep.mubr.f32.mxu0 0.0
    %1796 = vmatmul.mubr.f32.gmra.mrb[0].mxu0 %v45
    %v1797 = vpop.f32.mrb[0].mxu0
    %v1798 = vadd.f32 0.0, %v1797
    %v1799 = vpop.f32.mrb[0].mxu0
    %1800 = vmatprep.mubr.f32.mxu0 0.0
    %1801 = vmatmul.mubr.f32.gmra.mrb[0].mxu0 %v46
    %v1802 = vpop.f32.mrb[0].mxu0
    %v1803 = vadd.f32 0.0, %v1802
    %v1804 = vpop.f32.mrb[0].mxu0
    %1805 = vmatprep.mubr.f32.mxu0 0.0
    %1806 = vmatmul.mubr.f32.gmra.mrb[0].mxu0 %v47
    %v1807 = vpop.f32.mrb[0].mxu0
    %v1808 = vadd.f32 0.0, %v1807
    %v1809 = vpop.f32.mrb[0].mxu0
    %1810 = vmatprep.mubr.f32.mxu0 0.0
    %1811 = vmatmul.mubr.f32.gmra.mrb[0].mxu0 %v48
    %v1812 = vpop.f32.mrb[0].mxu0
    %v1813 = vadd.f32 0.0, %v1812
    %v1814 = vpop.f32.mrb[0].mxu0
    %1815 = vmatprep.mubr.f32.mxu0 0.0
    %1816 = vmatmul.mubr.f32.gmra.mrb[0].mxu0 %v49
    %v1817 = vpop.f32.mrb[0].mxu0
    %v1818 = vadd.f32 0.0, %v1817
    %v1819 = vpop.f32.mrb[0].mxu0
    %1820 = vmatprep.mubr.f32.mxu0 0.0
    %1821 = vmatmul.mubr.f32.gmra.mrb[0].mxu0 %v50
    %v1822 = vpop.f32.mrb[0].mxu0
    %v1823 = vadd.f32 0.0, %v1822
    %v1824 = vpop.f32.mrb[0].mxu0
    %1825 = vmatprep.mubr.f32.mxu0 0.0
    %1826 = vmatmul.mubr.f32.gmra.mrb[0].mxu0 %v51
    %v1827 = vpop.f32.mrb[0].mxu0
    %v1828 = vadd.f32 0.0, %v1827
    %v1829 = vpop.f32.mrb[0].mxu0
    %1830 = vmatprep.mubr.f32.mxu0 0.0
    %1831 = vmatmul.mubr.f32.gmra.mrb[0].mxu0 %v52
    %v1832 = vpop.f32.mrb[0].mxu0
    %v1833 = vadd.f32 0.0, %v1832
    %v1834 = vpop.f32.mrb[0].mxu0
    %1835 = vmatprep.mubr.f32.mxu0 0.0
    %1836 = vmatmul.mubr.f32.gmra.mrb[0].mxu0 %v53
    %v1837 = vpop.f32.mrb[0].mxu0
    %v1838 = vadd.f32 0.0, %v1837
    %v1839 = vpop.f32.mrb[0].mxu0
    %1840 = vmatprep.mubr.f32.mxu0 0.0
    %1841 = vmatmul.mubr.f32.gmra.mrb[0].mxu0 %v54
    %v1842 = vpop.f32.mrb[0].mxu0
    %v1843 = vadd.f32 0.0, %v1842
    %v1844 = vpop.f32.mrb[0].mxu0
    %1845 = vmatprep.mubr.f32.mxu0 0.0
    %1846 = vmatmul.mubr.f32.gmra.mrb[0].mxu0 %v55
    %v1847 = vpop.f32.mrb[0].mxu0
    %v1848 = vadd.f32 0.0, %v1847
    %v1849 = vpop.f32.mrb[0].mxu0
    %1850 = vmatprep.mubr.f32.mxu0 0.0
    %1851 = vmatmul.mubr.f32.gmra.mrb[0].mxu0 %v56
    %v1852 = vpop.f32.mrb[0].mxu0
    %v1853 = vadd.f32 0.0, %v1852
    %v1854 = vpop.f32.mrb[0].mxu0
    %1855 = vmatprep.mubr.f32.mxu0 0.0
    %1856 = vmatmul.mubr.f32.gmra.mrb[0].mxu0 %v57
    %v1857 = vpop.f32.mrb[0].mxu0
    %v1858 = vadd.f32 0.0, %v1857
    %v1859 = vpop.f32.mrb[0].mxu0
    %1860 = vdwg.mxu0
    %v1861 = vmul.f32 %v316, %v1700
    %v1862 = vmul.f32 %v316, %v1701
    %v1863 = vmul.f32 %v316, %v1702
    %v1864 = vmul.f32 %v316, %v1703
    %v1865 = vmul.f32 %v316, %v1704
    %v1866 = vmul.f32 %v316, %v1705
    %v1867 = vmul.f32 %v316, %v1706
    %v1868 = vmul.f32 %v316, %v1707
    %v1869 = vmul.f32 %v316, %v1708
    %v1870 = vmul.f32 %v316, %v1709
    %v1871 = vmul.f32 %v316, %v1710
    %v1872 = vmul.f32 %v316, %v1711
    %v1873 = vmul.f32 %v316, %v1712
    %v1874 = vmul.f32 %v316, %v1713
    %v1875 = vmul.f32 %v316, %v1714
    %v1876 = vmul.f32 %v316, %v1715
    %v1877 = vmul.f32 %v94, %v1783
    %v1878 = vmul.f32 %v99, %v1788
    %v1879 = vmul.f32 %v104, %v1793
    %v1880 = vmul.f32 %v109, %v1798
    %v1881 = vmul.f32 %v114, %v1803
    %v1882 = vmul.f32 %v119, %v1808
    %v1883 = vmul.f32 %v124, %v1813
    %v1884 = vmul.f32 %v129, %v1818
    %v1885 = vmul.f32 %v134, %v1823
    %v1886 = vmul.f32 %v139, %v1828
    %v1887 = vmul.f32 %v144, %v1833
    %v1888 = vmul.f32 %v149, %v1838
    %v1889 = vmul.f32 %v154, %v1843
    %v1890 = vmul.f32 %v159, %v1848
    %v1891 = vmul.f32 %v164, %v1853
    %v1892 = vmul.f32 %v169, %v1858
    %v1893 = vadd.f32 %v1861, %v1877
    %v1894 = vadd.f32 %v1862, %v1878
    %v1895 = vadd.f32 %v1863, %v1879
    %v1896 = vadd.f32 %v1864, %v1880
    %v1897 = vadd.f32 %v1865, %v1881
    %v1898 = vadd.f32 %v1866, %v1882
    %v1899 = vadd.f32 %v1867, %v1883
    %v1900 = vadd.f32 %v1868, %v1884
    %v1901 = vadd.f32 %v1869, %v1885
    %v1902 = vadd.f32 %v1870, %v1886
    %v1903 = vadd.f32 %v1871, %v1887
    %v1904 = vadd.f32 %v1872, %v1888
    %v1905 = vadd.f32 %v1873, %v1889
    %v1906 = vadd.f32 %v1874, %v1890
    %v1907 = vadd.f32 %v1875, %v1891
    %v1908 = vadd.f32 %v1876, %v1892
    %1909 = vmatprep.subr.mxu0 0.0
    %1910 = vmatpush1.msra.mxu0 %v1893
    %1911 = vmatprep.subr.mxu0 0.0
    %1912 = vmatpush1.msra.mxu0 %v1894
    %1913 = vmatprep.subr.mxu0 0.0
    %1914 = vmatpush1.msra.mxu0 %v1895
    %1915 = vmatprep.subr.mxu0 0.0
    %1916 = vmatpush1.msra.mxu0 %v1896
    %1917 = vmatprep.subr.mxu0 0.0
    %1918 = vmatpush1.msra.mxu0 %v1897
    %1919 = vmatprep.subr.mxu0 0.0
    %1920 = vmatpush1.msra.mxu0 %v1898
    %1921 = vmatprep.subr.mxu0 0.0
    %1922 = vmatpush1.msra.mxu0 %v1899
    %1923 = vmatprep.subr.mxu0 0.0
    %1924 = vmatpush1.msra.mxu0 %v1900
    %1925 = vmatprep.subr.mxu0 0.0
    %1926 = vmatpush1.msra.mxu0 %v1901
    %1927 = vmatprep.subr.mxu0 0.0
    %1928 = vmatpush1.msra.mxu0 %v1902
    %1929 = vmatprep.subr.mxu0 0.0
    %1930 = vmatpush1.msra.mxu0 %v1903
    %1931 = vmatprep.subr.mxu0 0.0
    %1932 = vmatpush1.msra.mxu0 %v1904
    %1933 = vmatprep.subr.mxu0 0.0
    %1934 = vmatpush1.msra.mxu0 %v1905
    %1935 = vmatprep.subr.mxu0 0.0
    %1936 = vmatpush1.msra.mxu0 %v1906
    %1937 = vmatprep.subr.mxu0 0.0
    %1938 = vmatpush1.msra.mxu0 %v1907
    %1939 = vmatprep.subr.mxu0 0.0
    %1940 = vmatpush1.msra.mxu0 %v1908
    %1941 = vmatprep.subr.mxu0 0.0
    %1942 = vmatpush1.msra.mxu0 0.0
    %1943 = vmatprep.subr.mxu0 0.0
    %1944 = vmatpush1.msra.mxu0 0.0
    %1945 = vmatprep.subr.mxu0 0.0
    %1946 = vmatpush1.msra.mxu0 0.0
    %1947 = vmatprep.subr.mxu0 0.0
    %1948 = vmatpush1.msra.mxu0 0.0
    %1949 = vmatprep.subr.mxu0 0.0
    %1950 = vmatpush1.msra.mxu0 0.0
    %1951 = vmatprep.subr.mxu0 0.0
    %1952 = vmatpush1.msra.mxu0 0.0
    %1953 = vmatprep.subr.mxu0 0.0
    %1954 = vmatpush1.msra.mxu0 0.0
    %1955 = vmatprep.subr.mxu0 0.0
    %1956 = vmatpush1.msra.mxu0 0.0
    %1957 = vmatprep.subr.mxu0 0.0
    %1958 = vmatpush1.msra.mxu0 0.0
    %1959 = vmatprep.subr.mxu0 0.0
    %1960 = vmatpush1.msra.mxu0 0.0
    %1961 = vmatprep.subr.mxu0 0.0
    %1962 = vmatpush1.msra.mxu0 0.0
    %1963 = vmatprep.subr.mxu0 0.0
    %1964 = vmatpush1.msra.mxu0 0.0
    %1965 = vmatprep.subr.mxu0 0.0
    %1966 = vmatpush1.msra.mxu0 0.0
    %1967 = vmatprep.subr.mxu0 0.0
    %1968 = vmatpush1.msra.mxu0 0.0
    %1969 = vmatprep.subr.mxu0 0.0
    %1970 = vmatpush1.msra.mxu0 0.0
    %1971 = vmatprep.subr.mxu0 0.0
    %1972 = vmatpush1.msra.mxu0 0.0
    %1973 = vmatprep.mubr.f32.mxu0 0.0
    %1974 = vmatmul.mubr.f32.gmra.mrb[0].mxu0 %v42
    %v1975 = vpop.f32.mrb[0].mxu0
    %v1976 = vadd.f32 0.0, %v1975
    %v1977 = vpop.f32.mrb[0].mxu0
    %1978 = vmatprep.mubr.f32.mxu0 0.0
    %1979 = vmatmul.mubr.f32.gmra.mrb[0].mxu0 %v43
    %v1980 = vpop.f32.mrb[0].mxu0
    %v1981 = vadd.f32 0.0, %v1980
    %v1982 = vpop.f32.mrb[0].mxu0
    %1983 = vmatprep.mubr.f32.mxu0 0.0
    %1984 = vmatmul.mubr.f32.gmra.mrb[0].mxu0 %v44
    %v1985 = vpop.f32.mrb[0].mxu0
    %v1986 = vadd.f32 0.0, %v1985
    %v1987 = vpop.f32.mrb[0].mxu0
    %1988 = vmatprep.mubr.f32.mxu0 0.0
    %1989 = vmatmul.mubr.f32.gmra.mrb[0].mxu0 %v45
    %v1990 = vpop.f32.mrb[0].mxu0
    %v1991 = vadd.f32 0.0, %v1990
    %v1992 = vpop.f32.mrb[0].mxu0
    %1993 = vmatprep.mubr.f32.mxu0 0.0
    %1994 = vmatmul.mubr.f32.gmra.mrb[0].mxu0 %v46
    %v1995 = vpop.f32.mrb[0].mxu0
    %v1996 = vadd.f32 0.0, %v1995
    %v1997 = vpop.f32.mrb[0].mxu0
    %1998 = vmatprep.mubr.f32.mxu0 0.0
    %1999 = vmatmul.mubr.f32.gmra.mrb[0].mxu0 %v47
    %v2000 = vpop.f32.mrb[0].mxu0
    %v2001 = vadd.f32 0.0, %v2000
    %v2002 = vpop.f32.mrb[0].mxu0
    %2003 = vmatprep.mubr.f32.mxu0 0.0
    %2004 = vmatmul.mubr.f32.gmra.mrb[0].mxu0 %v48
    %v2005 = vpop.f32.mrb[0].mxu0
    %v2006 = vadd.f32 0.0, %v2005
    %v2007 = vpop.f32.mrb[0].mxu0
    %2008 = vmatprep.mubr.f32.mxu0 0.0
    %2009 = vmatmul.mubr.f32.gmra.mrb[0].mxu0 %v49
    %v2010 = vpop.f32.mrb[0].mxu0
    %v2011 = vadd.f32 0.0, %v2010
    %v2012 = vpop.f32.mrb[0].mxu0
    %2013 = vmatprep.mubr.f32.mxu0 0.0
    %2014 = vmatmul.mubr.f32.gmra.mrb[0].mxu0 %v50
    %v2015 = vpop.f32.mrb[0].mxu0
    %v2016 = vadd.f32 0.0, %v2015
    %v2017 = vpop.f32.mrb[0].mxu0
    %2018 = vmatprep.mubr.f32.mxu0 0.0
    %2019 = vmatmul.mubr.f32.gmra.mrb[0].mxu0 %v51
    %v2020 = vpop.f32.mrb[0].mxu0
    %v2021 = vadd.f32 0.0, %v2020
    %v2022 = vpop.f32.mrb[0].mxu0
    %2023 = vmatprep.mubr.f32.mxu0 0.0
    %2024 = vmatmul.mubr.f32.gmra.mrb[0].mxu0 %v52
    %v2025 = vpop.f32.mrb[0].mxu0
    %v2026 = vadd.f32 0.0, %v2025
    %v2027 = vpop.f32.mrb[0].mxu0
    %2028 = vmatprep.mubr.f32.mxu0 0.0
    %2029 = vmatmul.mubr.f32.gmra.mrb[0].mxu0 %v53
    %v2030 = vpop.f32.mrb[0].mxu0
    %v2031 = vadd.f32 0.0, %v2030
    %v2032 = vpop.f32.mrb[0].mxu0
    %2033 = vmatprep.mubr.f32.mxu0 0.0
    %2034 = vmatmul.mubr.f32.gmra.mrb[0].mxu0 %v54
    %v2035 = vpop.f32.mrb[0].mxu0
    %v2036 = vadd.f32 0.0, %v2035
    %v2037 = vpop.f32.mrb[0].mxu0
    %2038 = vmatprep.mubr.f32.mxu0 0.0
    %2039 = vmatmul.mubr.f32.gmra.mrb[0].mxu0 %v55
    %v2040 = vpop.f32.mrb[0].mxu0
    %v2041 = vadd.f32 0.0, %v2040
    %v2042 = vpop.f32.mrb[0].mxu0
    %2043 = vmatprep.mubr.f32.mxu0 0.0
    %2044 = vmatmul.mubr.f32.gmra.mrb[0].mxu0 %v56
    %v2045 = vpop.f32.mrb[0].mxu0
    %v2046 = vadd.f32 0.0, %v2045
    %v2047 = vpop.f32.mrb[0].mxu0
    %2048 = vmatprep.mubr.f32.mxu0 0.0
    %2049 = vmatmul.mubr.f32.gmra.mrb[0].mxu0 %v57
    %v2050 = vpop.f32.mrb[0].mxu0
    %v2051 = vadd.f32 0.0, %v2050
    %v2052 = vpop.f32.mrb[0].mxu0
    %2053 = vdwg.mxu0
    %v2054 = vmul.f32 %v316, %v1893
    %v2055 = vmul.f32 %v316, %v1894
    %v2056 = vmul.f32 %v316, %v1895
    %v2057 = vmul.f32 %v316, %v1896
    %v2058 = vmul.f32 %v316, %v1897
    %v2059 = vmul.f32 %v316, %v1898
    %v2060 = vmul.f32 %v316, %v1899
    %v2061 = vmul.f32 %v316, %v1900
    %v2062 = vmul.f32 %v316, %v1901
    %v2063 = vmul.f32 %v316, %v1902
    %v2064 = vmul.f32 %v316, %v1903
    %v2065 = vmul.f32 %v316, %v1904
    %v2066 = vmul.f32 %v316, %v1905
    %v2067 = vmul.f32 %v316, %v1906
    %v2068 = vmul.f32 %v316, %v1907
    %v2069 = vmul.f32 %v316, %v1908
    %v2070 = vmul.f32 %v94, %v1976
    %v2071 = vmul.f32 %v99, %v1981
    %v2072 = vmul.f32 %v104, %v1986
    %v2073 = vmul.f32 %v109, %v1991
    %v2074 = vmul.f32 %v114, %v1996
    %v2075 = vmul.f32 %v119, %v2001
    %v2076 = vmul.f32 %v124, %v2006
    %v2077 = vmul.f32 %v129, %v2011
    %v2078 = vmul.f32 %v134, %v2016
    %v2079 = vmul.f32 %v139, %v2021
    %v2080 = vmul.f32 %v144, %v2026
    %v2081 = vmul.f32 %v149, %v2031
    %v2082 = vmul.f32 %v154, %v2036
    %v2083 = vmul.f32 %v159, %v2041
    %v2084 = vmul.f32 %v164, %v2046
    %v2085 = vmul.f32 %v169, %v2051
    %v2086 = vadd.f32 %v2054, %v2070
    %v2087 = vadd.f32 %v2055, %v2071
    %v2088 = vadd.f32 %v2056, %v2072
    %v2089 = vadd.f32 %v2057, %v2073
    %v2090 = vadd.f32 %v2058, %v2074
    %v2091 = vadd.f32 %v2059, %v2075
    %v2092 = vadd.f32 %v2060, %v2076
    %v2093 = vadd.f32 %v2061, %v2077
    %v2094 = vadd.f32 %v2062, %v2078
    %v2095 = vadd.f32 %v2063, %v2079
    %v2096 = vadd.f32 %v2064, %v2080
    %v2097 = vadd.f32 %v2065, %v2081
    %v2098 = vadd.f32 %v2066, %v2082
    %v2099 = vadd.f32 %v2067, %v2083
    %v2100 = vadd.f32 %v2068, %v2084
    %v2101 = vadd.f32 %v2069, %v2085
    %vm2102 = vcmask 15360
    %2103 = vst.msk [vmem:[%s5] sm:$0xff] %vm2102, %v2086
    %2104 = vst.msk [vmem:[%s5 + $0x8] sm:$0xff] %vm2102, %v2087
    %2105 = vst.msk [vmem:[%s5 + $0x10] sm:$0xff] %vm2102, %v2088
    %2106 = vst.msk [vmem:[%s5 + $0x18] sm:$0xff] %vm2102, %v2089
    %2107 = vst.msk [vmem:[%s5 + $0x20] sm:$0xff] %vm2102, %v2090
    %2108 = vst.msk [vmem:[%s5 + $0x28] sm:$0xff] %vm2102, %v2091
    %2109 = vst.msk [vmem:[%s5 + $0x30] sm:$0xff] %vm2102, %v2092
    %2110 = vst.msk [vmem:[%s5 + $0x38] sm:$0xff] %vm2102, %v2093
    %2111 = vst.msk [vmem:[%s5 + $0x40] sm:$0xff] %vm2102, %v2094
    %2112 = vst.msk [vmem:[%s5 + $0x48] sm:$0xff] %vm2102, %v2095
    %2113 = vst.msk [vmem:[%s5 + $0x50] sm:$0xff] %vm2102, %v2096
    %2114 = vst.msk [vmem:[%s5 + $0x58] sm:$0xff] %vm2102, %v2097
    %2115 = vst.msk [vmem:[%s5 + $0x60] sm:$0xff] %vm2102, %v2098
    %2116 = vst.msk [vmem:[%s5 + $0x68] sm:$0xff] %vm2102, %v2099
    %2117 = vst.msk [vmem:[%s5 + $0x70] sm:$0xff] %vm2102, %v2100
    %2118 = vst.msk [vmem:[%s5 + $0x78] sm:$0xff] %vm2102, %v2101
    %v2119 = vld [vmem:[%s4] sm:$0xff]
    %v2120 = vld [vmem:[%s4 + $0x8] sm:$0xff]
    %v2121 = vld [vmem:[%s4 + $0x10] sm:$0xff]
    %v2122 = vld [vmem:[%s4 + $0x18] sm:$0xff]
    %v2123 = vld [vmem:[%s4 + $0x20] sm:$0xff]
    %v2124 = vld [vmem:[%s4 + $0x28] sm:$0xff]
    %v2125 = vld [vmem:[%s4 + $0x30] sm:$0xff]
    %v2126 = vld [vmem:[%s4 + $0x38] sm:$0xff]
    %v2127 = vld [vmem:[%s4 + $0x40] sm:$0xff]
    %v2128 = vld [vmem:[%s4 + $0x48] sm:$0xff]
    %v2129 = vld [vmem:[%s4 + $0x50] sm:$0xff]
    %v2130 = vld [vmem:[%s4 + $0x58] sm:$0xff]
    %v2131 = vld [vmem:[%s4 + $0x60] sm:$0xff]
    %v2132 = vld [vmem:[%s4 + $0x68] sm:$0xff]
    %v2133 = vld [vmem:[%s4 + $0x70] sm:$0xff]
    %v2134 = vld [vmem:[%s4 + $0x78] sm:$0xff]
    %v2135 = vmax.f32 %v2086, 1e-06
    %v2136 = vmax.f32 %v2087, 1e-06
    %v2137 = vmax.f32 %v2088, 1e-06
    %v2138 = vmax.f32 %v2089, 1e-06
    %v2139 = vmax.f32 %v2090, 1e-06
    %v2140 = vmax.f32 %v2091, 1e-06
    %v2141 = vmax.f32 %v2092, 1e-06
    %v2142 = vmax.f32 %v2093, 1e-06
    %v2143 = vmax.f32 %v2094, 1e-06
    %v2144 = vmax.f32 %v2095, 1e-06
    %v2145 = vmax.f32 %v2096, 1e-06
    %v2146 = vmax.f32 %v2097, 1e-06
    %v2147 = vmax.f32 %v2098, 1e-06
    %v2148 = vmax.f32 %v2099, 1e-06
    %v2149 = vmax.f32 %v2100, 1e-06
    %v2150 = vmax.f32 %v2101, 1e-06
    %v2151 = vlog2.pop %v2135
    %v2152 = vmul.f32 %v2151, 0.6931472
    %v2153 = vlog2.pop %v2136
    %v2154 = vmul.f32 %v2153, 0.6931472
    %v2155 = vlog2.pop %v2137
    %v2156 = vmul.f32 %v2155, 0.6931472
    %v2157 = vlog2.pop %v2138
    %v2158 = vmul.f32 %v2157, 0.6931472
    %v2159 = vlog2.pop %v2139
    %v2160 = vmul.f32 %v2159, 0.6931472
    %v2161 = vlog2.pop %v2140
    %v2162 = vmul.f32 %v2161, 0.6931472
    %v2163 = vlog2.pop %v2141
    %v2164 = vmul.f32 %v2163, 0.6931472
    %v2165 = vlog2.pop %v2142
    %v2166 = vmul.f32 %v2165, 0.6931472
    %v2167 = vlog2.pop %v2143
    %v2168 = vmul.f32 %v2167, 0.6931472
    %v2169 = vlog2.pop %v2144
    %v2170 = vmul.f32 %v2169, 0.6931472
    %v2171 = vlog2.pop %v2145
    %v2172 = vmul.f32 %v2171, 0.6931472
    %v2173 = vlog2.pop %v2146
    %v2174 = vmul.f32 %v2173, 0.6931472
    %v2175 = vlog2.pop %v2147
    %v2176 = vmul.f32 %v2175, 0.6931472
    %v2177 = vlog2.pop %v2148
    %v2178 = vmul.f32 %v2177, 0.6931472
    %v2179 = vlog2.pop %v2149
    %v2180 = vmul.f32 %v2179, 0.6931472
    %v2181 = vlog2.pop %v2150
    %v2182 = vmul.f32 %v2181, 0.6931472
    %v2183 = vmul.f32 %v2119, %v2152
    %v2184 = vmul.f32 %v2120, %v2154
    %v2185 = vmul.f32 %v2121, %v2156
    %v2186 = vmul.f32 %v2122, %v2158
    %v2187 = vmul.f32 %v2123, %v2160
    %v2188 = vmul.f32 %v2124, %v2162
    %v2189 = vmul.f32 %v2125, %v2164
    %v2190 = vmul.f32 %v2126, %v2166
    %v2191 = vmul.f32 %v2127, %v2168
    %v2192 = vmul.f32 %v2128, %v2170
    %v2193 = vmul.f32 %v2129, %v2172
    %v2194 = vmul.f32 %v2130, %v2174
    %v2195 = vmul.f32 %v2131, %v2176
    %v2196 = vmul.f32 %v2132, %v2178
    %v2197 = vmul.f32 %v2133, %v2180
    %v2198 = vmul.f32 %v2134, %v2182
    %v2199 = vsel %vm2102, %v2183, 0.0
    %v2200 = vsel %vm2102, %v2184, 0.0
    %v2201 = vadd.f32 %v2199, %v2200
    %v2202 = vsel %vm2102, %v2185, 0.0
    %v2203 = vadd.f32 %v2201, %v2202
    %v2204 = vsel %vm2102, %v2186, 0.0
    %v2205 = vadd.f32 %v2203, %v2204
    %v2206 = vsel %vm2102, %v2187, 0.0
    %v2207 = vadd.f32 %v2205, %v2206
    %v2208 = vsel %vm2102, %v2188, 0.0
    %v2209 = vadd.f32 %v2207, %v2208
    %v2210 = vsel %vm2102, %v2189, 0.0
    %v2211 = vadd.f32 %v2209, %v2210
    %v2212 = vsel %vm2102, %v2190, 0.0
    %v2213 = vadd.f32 %v2211, %v2212
    %v2214 = vsel %vm2102, %v2191, 0.0
    %v2215 = vadd.f32 %v2213, %v2214
    %v2216 = vsel %vm2102, %v2192, 0.0
    %v2217 = vadd.f32 %v2215, %v2216
    %v2218 = vsel %vm2102, %v2193, 0.0
    %v2219 = vadd.f32 %v2217, %v2218
    %v2220 = vsel %vm2102, %v2194, 0.0
    %v2221 = vadd.f32 %v2219, %v2220
    %v2222 = vsel %vm2102, %v2195, 0.0
    %v2223 = vadd.f32 %v2221, %v2222
    %v2224 = vsel %vm2102, %v2196, 0.0
    %v2225 = vadd.f32 %v2223, %v2224
    %v2226 = vsel %vm2102, %v2197, 0.0
    %v2227 = vadd.f32 %v2225, %v2226
    %v2228 = vsel %vm2102, %v2198, 0.0
    %v2229 = vadd.f32 %v2227, %v2228
    %2230 = vadd.xlane.f32.xlu0 %v2229
    %v2231 = vpop.xlane.xlu0 %2230
    %v2232 = vrot.slane %v2231, 4
    %v2233 = vadd.f32 %v2231, %v2232
    %v2234 = vrot.slane %v2233, 2
    %v2235 = vadd.f32 %v2233, %v2234
    %v2236 = vrot.slane %v2235, 1
    %v2237 = vadd.f32 %v2235, %v2236
    %s2238 = vtos %v2237
    %s2239 = ssub.f32 0.0, %s2238
    %s2240 = scalar_lea.smem [#allocation3], 0
    %2241 = sst [smem:[%s2240]] %s2239
    // Predicated region
    $region22: #{tpu_custom_call.1} parent=1 // pred_check
      _
    $region23: #{tpu_custom_call.1} parent=1 // pred_check_branch
      %2243 = sbr.rel (0) target = $region25
    $region24: #{tpu_custom_call.1} parent=1 // pred_region
      _
    $region25: #{tpu_custom_call.1} parent=1 // pred_fallthru
      _
    // Predicated region
    $region26: #{tpu_custom_call.1} parent=1 // pred_check
      _
    $region27: #{tpu_custom_call.1} parent=1 // pred_check_branch
      %2245 = sbr.rel (0) target = $region29
    $region28: #{tpu_custom_call.1} parent=1 // pred_region
      %s2247 = ssub.s32 16, 16
      %2248 = vsyncadd [#allocation4], %s2247
      %2251 = dma.smem_to_hbm [#allocation3], 16, %s6, [#allocation4]
    $region29: #{tpu_custom_call.1} parent=1 // pred_fallthru
      _
    // Predicated region
    $region30: #{tpu_custom_call.1} parent=1 // pred_check
      _
    $region31: #{tpu_custom_call.1} parent=1 // pred_check_branch
      %2253 = sbr.rel (0) target = $region33
    $region32: #{tpu_custom_call.1} parent=1 // pred_region
      _
    $region33: #{tpu_custom_call.1} parent=1 // pred_fallthru
      _
    // Predicated region
    $region34: #{tpu_custom_call.1} parent=1 // pred_check
      _
    $region35: #{tpu_custom_call.1} parent=1 // pred_check_branch
      %2255 = sbr.rel (0) target = $region37
    $region36: #{tpu_custom_call.1} parent=1 // pred_region
      %2256 = dma.done [#allocation4], 16
    $region37: #{tpu_custom_call.1} parent=1 // pred_fallthru
      _
    %2257 = sfence
    %2258 = vsyncpa [#allocation4], 1

</llo_original>
